<compile_context>
chip_gen: v7x
topology: tpu7x:2x2x1
jax: 0.10.0
libtpu: 0.0.40
codegen_flags: <defaults>
</compile_context>

<pallas_src>
import functools
import math

import numpy as np

import jax
import jax.numpy as jnp
from jax.experimental import pallas as pl
from jax.experimental.pallas import tpu as pltpu


def _last_agg_kernel(item_ref, adj_ref, wmat_ref, b1_ref, wlw_ref, out_ref, *,
                     n_nodes, inv_sqrt_d, inv_n, matmul_dtype):
    f32 = jnp.float32
    G, D = item_ref.shape            # G = bt * N   (node rows this grid step)
    Bt = out_ref.shape[0]            # graphs this grid step

    full_f32 = jnp.dtype(matmul_dtype) == jnp.dtype(jnp.float32)
    prec = jax.lax.Precision.HIGHEST if full_f32 else jax.lax.Precision.DEFAULT

    def mm(a, w):
        # MXU matmul, f32 accumulation.  Weight slab is pre-cast host-side.
        return jnp.dot(a.astype(matmul_dtype), w,
                       preferred_element_type=f32, precision=prec)

    def sigmoid(z):
        # exp and approximate reciprocal both live on the EUP slot.
        return pl.reciprocal(1.0 + jnp.exp(-z), approx=True)

    item = item_ref[...].astype(f32)          # (G, D)   small
    adj3 = adj_ref[...]                       # (G, M, D) input dtype, no extra copy
    b1 = b1_ref[...].astype(f32)              # (1, D)   linear_one bias
    wlw = wlw_ref[...].astype(f32)            # (1, D)   linear_weight row

    # packed, pre-folded / pre-transposed parameter slab (static, aligned slices)
    qk = wmat_ref[0 * D:1 * D, :]             # k_1 @ q_1^T   (folded host-side)
    wg = wmat_ref[1 * D:3 * D, :]             # [w_1; w_2]                 (2D, D)
    l1t = wmat_ref[3 * D:4 * D, :]            # linear_one.weight^T
    l2t = wmat_ref[4 * D:5 * D, :]            # linear_two.weight^T

    # --- neighbor attention ---------------------------------------------------
    # alpha[g,m] = adj[g,m,:] . (item[g,:] @ k_1 @ q_1^T) / sqrt(D)
    v = mm(item, qk)                                              # (G, D)
    alpha = jnp.sum(adj3 * v[:, None, :], axis=-1,
                    keepdims=True) * inv_sqrt_d                   # (G, M, 1)
    agg = jnp.sum(alpha * adj3, axis=1).astype(f32)               # (G, D)
    # TODO(synk): F.dropout(agg, p) omitted (identity in eval mode); training
    # would build the mask with pltpu.prng_seed + pltpu.prng_random_bits.

    # --- gated fusion of item and aggregated neighborhood ----------------------
    gate = sigmoid(mm(jnp.concatenate([item, agg], axis=-1), wg))  # (G, D)
    final = item + gate * (agg - item)                             # (1-w)x + w*agg

    # --- soft-attention readout over the N nodes of each graph -----------------
    final3 = final.reshape(Bt, n_nodes, D)                         # free split
    avg = jnp.sum(final3, axis=1) * inv_n                          # (Bt, D)
    pre = (mm(final, l1t).reshape(Bt, n_nodes, D)
           + mm(avg, l2t)[:, None, :] + b1)                        # (Bt, N, D)
    s = sigmoid(pre)
    beta = jnp.sum(s * wlw, axis=-1, keepdims=True)                # (Bt, N, 1)
    out_ref[...] = jnp.sum(beta * final3, axis=1).astype(out_ref.dtype)


def _vmem_capacity_bytes():
    try:
        return int(pltpu.get_tpu_info().vmem_capacity_bytes)
    except Exception:
        return 64 << 20          # conservative (v7x-sized) fallback


def _pick_batch_block(B, N, M, D, in_itemsize, param_bytes, vmem_cap):
    """Largest per-step graph count that fits VMEM, preferring >= 2 grid steps."""
    # per-graph per-step footprint: double-buffered I/O blocks (input dtype)
    # plus the adj-/item-sized f32 temporaries created inside the kernel.
    per_b = (2 * (N * M * D + N * D) * in_itemsize     # adj + item blocks (x2 bufs)
             + 2 * D * 4                               # out block (x2 bufs)
             + 4 * N * M * D * 3                       # adj-sized f32 temps
             + 4 * N * D * 12)                         # item-sized f32 temps
    budget = max(per_b, int(0.45 * vmem_cap) - 2 * param_bytes)
    max_bt = max(1, budget // per_b)
    # lane/sublane rule: the (bt, D) output block needs bt % 8 == 0 unless bt == B;
    # same for the (bt*N, D) item block.
    divisors = [d for d in range(1, B + 1) if B % d == 0]
    valid = [d for d in divisors if d == B or (d % 8 == 0 and (d * N) % 8 == 0)]
    multi = [d for d in valid if d <= max_bt and B // d >= 2]   # >=2 steps (v7x 2 TCs)
    if multi:
        return max(multi), per_b
    fitting = [d for d in valid if d <= max_bt]
    return (max(fitting) if fitting else min(valid)), per_b


def last_aggregator(item_hidden, adj_hidden, params, *, batch_block=None,
                    matmul_dtype=jnp.float32, interpret=False):
    """item_hidden: (B, N, D); adj_hidden: (B, N, M, D); params: dict (see main)."""
    B, N, M, D = adj_hidden.shape
    assert item_hidden.shape == (B, N, D)

    # ---- fold / pack parameters host-side (lane-dense, pre-cast) --------------
    hi = jax.lax.Precision.HIGHEST
    qk = jnp.dot(params["k_1"].astype(jnp.float32),
                 params["q_1"].astype(jnp.float32).T, precision=hi)   # k_1 @ q_1^T
    wmat = jnp.concatenate(
        [qk, params["w_1"], params["w_2"],
         params["linear_one_w"].T, params["linear_two_w"].T],
        axis=0).astype(matmul_dtype)                                   # (5D, D)
    b1 = params["linear_one_b"].reshape(1, D).astype(jnp.float32)      # (1, D)
    wlw = params["linear_weight_w"].reshape(1, D).astype(jnp.float32)  # (1, D)

    # ---- flatten graph rows host-side (kernel sees a rank-3 adj view) ---------
    item2 = item_hidden.reshape(B * N, D)
    adj3 = adj_hidden.reshape(B * N, M, D)

    in_itemsize = jnp.dtype(item_hidden.dtype).itemsize
    param_bytes = wmat.size * jnp.dtype(matmul_dtype).itemsize + 8 * D
    vmem_cap = _vmem_capacity_bytes()

    if batch_block is None:
        bt, per_b = _pick_batch_block(B, N, M, D, in_itemsize, param_bytes, vmem_cap)
    else:
        bt = int(batch_block)
        _, per_b = _pick_batch_block(B, N, M, D, in_itemsize, param_bytes, vmem_cap)
        if B % bt != 0 or not (bt == B or (bt % 8 == 0 and (bt * N) % 8 == 0)):
            raise ValueError("batch_block must divide B and be B or a multiple of 8")
    grid = (B // bt,)

    kernel = functools.partial(
        _last_agg_kernel, n_nodes=N, inv_sqrt_d=1.0 / math.sqrt(D),
        inv_n=1.0 / N, matmul_dtype=matmul_dtype)

    # VMEM request: real per-step footprint, capped well below physical VMEM
    # (v7x: ~45 of 64 MiB; v5e/v6e: ~90 of 128 MiB) to leave compiler scratch.
    need = bt * per_b + 2 * param_bytes + (1 << 20)
    cap70 = int(0.7 * vmem_cap)
    vmem_limit = int(min(cap70, max(16 << 20, 2 * need)))
    vmem_limit = max(vmem_limit, min(cap70, need))

    # Advisory cost so XLA can overlap neighbouring ops with this custom call.
    flops = 2 * B * N * D * D * 4 + 2 * B * D * D + 8 * B * N * M * D
    bytes_accessed = ((item2.size + adj3.size + B * D) * in_itemsize
                      + wmat.size * jnp.dtype(matmul_dtype).itemsize + 8 * D)
    cost = pl.CostEstimate(flops=int(flops), transcendentals=int(4 * B * N * D),
                           bytes_accessed=int(bytes_accessed))

    return pl.pallas_call(
        kernel,
        out_shape=jax.ShapeDtypeStruct((B, D), item_hidden.dtype),
        grid=grid,
        in_specs=[
            pl.BlockSpec((bt * N, D), lambda b: (b, 0)),        # item rows
            pl.BlockSpec((bt * N, M, D), lambda b: (b, 0, 0)),  # adj rows (3-D view)
            pl.BlockSpec((5 * D, D), lambda b: (0, 0)),         # packed weights
            pl.BlockSpec((1, D), lambda b: (0, 0)),             # linear_one bias
            pl.BlockSpec((1, D), lambda b: (0, 0)),             # linear_weight row
        ],
        out_specs=pl.BlockSpec((bt, D), lambda b: (b, 0)),
        compiler_params=pltpu.CompilerParams(
            dimension_semantics=("parallel",),
            vmem_limit_bytes=vmem_limit,
        ),
        cost_estimate=cost,
        interpret=interpret,
    )(item2, adj3, wmat, b1, wlw)


def _reference(item_hidden, adj_hidden, params):
    """Pure-NumPy float32 mirror of LastAggregator.forward (eval mode)."""
    x = np.asarray(item_hidden, np.float32)
    a = np.asarray(adj_hidden, np.float32)
    q1 = np.asarray(params["q_1"], np.float32)
    k1 = np.asarray(params["k_1"], np.float32)
    w1 = np.asarray(params["w_1"], np.float32)
    w2 = np.asarray(params["w_2"], np.float32)
    l1w = np.asarray(params["linear_one_w"], np.float32)
    l1b = np.asarray(params["linear_one_b"], np.float32)
    l2w = np.asarray(params["linear_two_w"], np.float32)
    lww = np.asarray(params["linear_weight_w"], np.float32)
    B, N, M, D = a.shape

    def sig(z):
        return 1.0 / (1.0 + np.exp(-z))

    query = a @ q1                                              # (B, N, M, D)
    key = x[:, :, None, :] @ k1                                 # (B, N, 1, D)
    alpha = query @ np.swapaxes(key, -1, -2) / math.sqrt(D)     # (B, N, M, 1)
    agg = np.sum(alpha * a, axis=-2)                            # (B, N, D)
    w = sig(x @ w1 + agg @ w2)
    final = (1.0 - w) * x + w * agg
    avg = np.sum(final, axis=1, keepdims=True) / N
    s = sig(final @ l1w.T + l1b + avg @ l2w.T)
    beta = s @ lww.T                                            # (B, N, 1)
    return np.sum(beta * final, axis=1)                         # (B, D)


if __name__ == "__main__":
    B, N, M, D = 2, 8, 8, 32

    key = jax.random.PRNGKey(0)
    ks = jax.random.split(key, 10)
    scale = 1.0 / math.sqrt(D)

    item_hidden = jax.random.normal(ks[0], (B, N, D), dtype=jnp.float32)
    adj_hidden = jax.random.normal(ks[1], (B, N, M, D), dtype=jnp.float32)
    params = {
        "q_1": jax.random.uniform(ks[2], (D, D), jnp.float32, -scale, scale),
        "k_1": jax.random.uniform(ks[3], (D, D), jnp.float32, -scale, scale),
        "w_1": jax.random.uniform(ks[4], (D, D), jnp.float32, -scale, scale),
        "w_2": jax.random.uniform(ks[5], (D, D), jnp.float32, -scale, scale),
        "linear_one_w": jax.random.uniform(ks[6], (D, D), jnp.float32, -scale, scale),
        "linear_one_b": jax.random.uniform(ks[7], (D,), jnp.float32, -scale, scale),
        "linear_two_w": jax.random.uniform(ks[8], (D, D), jnp.float32, -scale, scale),
        "linear_weight_w": jax.random.uniform(ks[9], (1, D), jnp.float32, -scale, scale),
    }

    out = last_aggregator(item_hidden, adj_hidden, params)
    out = jax.block_until_ready(out)

    ref = _reference(item_hidden, adj_hidden, params)
    assert out.shape == (B, D)
    err = float(np.max(np.abs(np.asarray(out, np.float32) - ref)))
    # f32 MXU accumulation order + approx (EUP) reciprocal in the sigmoids differ
    # slightly from NumPy; 5e-3 is still far below any formula-level error.
    assert np.allclose(np.asarray(out, np.float32), ref, atol=5e-3, rtol=5e-3), (
        f"max |err| = {err}")
    print("KERNEL_OK")
</pallas_src>

<mosaic_0001>
module attributes {stable_mosaic.version = 11 : i64} {
  func.func @_last_agg_kernel(%arg0: i32, %arg1: memref<16x32xf32, #tpu.memory_space<vmem>>, %arg2: memref<16x8x32xf32, #tpu.memory_space<vmem>>, %arg3: memref<160x32xf32, #tpu.memory_space<vmem>>, %arg4: memref<1x32xf32, #tpu.memory_space<vmem>>, %arg5: memref<1x32xf32, #tpu.memory_space<vmem>>, %arg6: memref<2x32xf32, #tpu.memory_space<vmem>>) attributes {dimension_semantics = [#tpu.dimension_semantics<parallel>], iteration_bounds = array<i64: 1>, scalar_prefetch = 0 : i64, scratch_operands = 0 : i64, tpu.core_type = #tpu.core_type<tc>, window_params = [{transform_indices = @transform_0, window_bounds = array<i64: 16, 32>}, {transform_indices = @transform_1, window_bounds = array<i64: 16, 8, 32>}, {pipeline_mode = #tpu.pipeline_mode<synchronous>, transform_indices = @transform_2, window_bounds = array<i64: 160, 32>}, {pipeline_mode = #tpu.pipeline_mode<synchronous>, transform_indices = @transform_3, window_bounds = array<i64: 1, 32>}, {pipeline_mode = #tpu.pipeline_mode<synchronous>, transform_indices = @transform_4, window_bounds = array<i64: 1, 32>}, {transform_indices = @transform_5, window_bounds = array<i64: 2, 32>}]} {
    %c0 = arith.constant 0 : index
    %c0_0 = arith.constant 0 : index
    %0 = vector.load %arg1[%c0, %c0_0] : memref<16x32xf32, #tpu.memory_space<vmem>>, vector<16x32xf32>
    %c0_1 = arith.constant 0 : index
    %c0_2 = arith.constant 0 : index
    %c0_3 = arith.constant 0 : index
    %1 = vector.load %arg2[%c0_1, %c0_2, %c0_3] : memref<16x8x32xf32, #tpu.memory_space<vmem>>, vector<16x8x32xf32>
    %c0_4 = arith.constant 0 : index
    %c0_5 = arith.constant 0 : index
    %2 = vector.load %arg4[%c0_4, %c0_5] : memref<1x32xf32, #tpu.memory_space<vmem>>, vector<1x32xf32>
    %c0_6 = arith.constant 0 : index
    %c0_7 = arith.constant 0 : index
    %3 = vector.load %arg5[%c0_6, %c0_7] : memref<1x32xf32, #tpu.memory_space<vmem>>, vector<1x32xf32>
    %c0_8 = arith.constant 0 : index
    %c0_9 = arith.constant 0 : index
    %4 = vector.load %arg3[%c0_8, %c0_9] : memref<160x32xf32, #tpu.memory_space<vmem>>, vector<32x32xf32>
    %c32 = arith.constant 32 : index
    %c0_10 = arith.constant 0 : index
    %5 = vector.load %arg3[%c32, %c0_10] : memref<160x32xf32, #tpu.memory_space<vmem>>, vector<64x32xf32>
    %c96 = arith.constant 96 : index
    %c0_11 = arith.constant 0 : index
    %6 = vector.load %arg3[%c96, %c0_11] : memref<160x32xf32, #tpu.memory_space<vmem>>, vector<32x32xf32>
    %c128 = arith.constant 128 : index
    %c0_12 = arith.constant 0 : index
    %7 = vector.load %arg3[%c128, %c0_12] : memref<160x32xf32, #tpu.memory_space<vmem>>, vector<32x32xf32>
    %cst = arith.constant dense<0.000000e+00> : vector<16x32xf32>
    %8 = tpu.matmul %0, %4, %cst {dimension_numbers = #tpu.dot_dimension_numbers<[1], [0], [0], [1], [0, 0, 1, 1], [], []>, precision = #tpu.contract_precision<fp32>} : vector<16x32xf32>, vector<32x32xf32>, vector<16x32xf32> -> vector<16x32xf32>
    %9 = vector.shape_cast %8 : vector<16x32xf32> to vector<16x1x32xf32>
    %10 = vector.broadcast %9 : vector<16x1x32xf32> to vector<16x8x32xf32>
    %11 = arith.mulf %1, %10 : vector<16x8x32xf32>
    %cst_13 = arith.constant dense<0.000000e+00> : vector<16x8xf32>
    %12 = vector.multi_reduction <add>, %11, %cst_13 [2] : vector<16x8x32xf32> to vector<16x8xf32>
    %13 = vector.shape_cast %12 : vector<16x8xf32> to vector<16x8x1xf32>
    %cst_14 = arith.constant 0.176776692 : f32
    %14 = vector.broadcast %cst_14 : f32 to vector<16x8x1xf32>
    %15 = arith.mulf %13, %14 : vector<16x8x1xf32>
    %16 = vector.broadcast %15 : vector<16x8x1xf32> to vector<16x8x32xf32>
    %17 = arith.mulf %16, %1 : vector<16x8x32xf32>
    %cst_15 = arith.constant dense<0.000000e+00> : vector<16x32xf32>
    %18 = vector.multi_reduction <add>, %17, %cst_15 [1] : vector<16x8x32xf32> to vector<16x32xf32>
    %19 = tpu.concatenate %0, %18 in 1 : vector<16x32xf32>, vector<16x32xf32> -> vector<16x64xf32>
    %cst_16 = arith.constant dense<0.000000e+00> : vector<16x32xf32>
    %20 = tpu.matmul %19, %5, %cst_16 {dimension_numbers = #tpu.dot_dimension_numbers<[1], [0], [0], [1], [0, 0, 1, 1], [], []>, precision = #tpu.contract_precision<fp32>} : vector<16x64xf32>, vector<64x32xf32>, vector<16x32xf32> -> vector<16x32xf32>
    %cst_17 = arith.constant 0.000000e+00 : f32
    %21 = vector.broadcast %cst_17 : f32 to vector<16x32xf32>
    %22 = arith.subf %21, %20 : vector<16x32xf32>
    %23 = math.exp %22 : vector<16x32xf32>
    %cst_18 = arith.constant 1.000000e+00 : f32
    %24 = vector.broadcast %cst_18 : f32 to vector<16x32xf32>
    %25 = arith.addf %24, %23 : vector<16x32xf32>
    %26 = tpu.reciprocal %25 {approx = true} : vector<16x32xf32> -> vector<16x32xf32>
    %27 = arith.subf %18, %0 : vector<16x32xf32>
    %28 = arith.mulf %26, %27 : vector<16x32xf32>
    %29 = arith.addf %0, %28 : vector<16x32xf32>
    %30 = vector.shape_cast %29 : vector<16x32xf32> to vector<2x8x32xf32>
    %cst_19 = arith.constant dense<0.000000e+00> : vector<2x32xf32>
    %31 = vector.multi_reduction <add>, %30, %cst_19 [1] : vector<2x8x32xf32> to vector<2x32xf32>
    %cst_20 = arith.constant 1.250000e-01 : f32
    %32 = vector.broadcast %cst_20 : f32 to vector<2x32xf32>
    %33 = arith.mulf %31, %32 : vector<2x32xf32>
    %cst_21 = arith.constant dense<0.000000e+00> : vector<16x32xf32>
    %34 = tpu.matmul %29, %6, %cst_21 {dimension_numbers = #tpu.dot_dimension_numbers<[1], [0], [0], [1], [0, 0, 1, 1], [], []>, precision = #tpu.contract_precision<fp32>} : vector<16x32xf32>, vector<32x32xf32>, vector<16x32xf32> -> vector<16x32xf32>
    %35 = vector.shape_cast %34 : vector<16x32xf32> to vector<2x8x32xf32>
    %cst_22 = arith.constant dense<0.000000e+00> : vector<2x32xf32>
    %36 = tpu.matmul %33, %7, %cst_22 {dimension_numbers = #tpu.dot_dimension_numbers<[1], [0], [0], [1], [0, 0, 1, 1], [], []>, precision = #tpu.contract_precision<fp32>} : vector<2x32xf32>, vector<32x32xf32>, vector<2x32xf32> -> vector<2x32xf32>
    %37 = vector.shape_cast %36 : vector<2x32xf32> to vector<2x1x32xf32>
    %38 = vector.broadcast %37 : vector<2x1x32xf32> to vector<2x8x32xf32>
    %39 = arith.addf %35, %38 : vector<2x8x32xf32>
    %40 = vector.shape_cast %2 : vector<1x32xf32> to vector<1x1x32xf32>
    %41 = vector.broadcast %40 : vector<1x1x32xf32> to vector<2x8x32xf32>
    %42 = arith.addf %39, %41 : vector<2x8x32xf32>
    %cst_23 = arith.constant 0.000000e+00 : f32
    %43 = vector.broadcast %cst_23 : f32 to vector<2x8x32xf32>
    %44 = arith.subf %43, %42 : vector<2x8x32xf32>
    %45 = math.exp %44 : vector<2x8x32xf32>
    %cst_24 = arith.constant 1.000000e+00 : f32
    %46 = vector.broadcast %cst_24 : f32 to vector<2x8x32xf32>
    %47 = arith.addf %46, %45 : vector<2x8x32xf32>
    %48 = tpu.reciprocal %47 {approx = true} : vector<2x8x32xf32> -> vector<2x8x32xf32>
    %49 = vector.shape_cast %3 : vector<1x32xf32> to vector<1x1x32xf32>
    %50 = vector.broadcast %49 : vector<1x1x32xf32> to vector<2x8x32xf32>
    %51 = arith.mulf %48, %50 : vector<2x8x32xf32>
    %cst_25 = arith.constant dense<0.000000e+00> : vector<2x8xf32>
    %52 = vector.multi_reduction <add>, %51, %cst_25 [2] : vector<2x8x32xf32> to vector<2x8xf32>
    %53 = vector.shape_cast %52 : vector<2x8xf32> to vector<2x8x1xf32>
    %54 = vector.broadcast %53 : vector<2x8x1xf32> to vector<2x8x32xf32>
    %55 = arith.mulf %54, %30 : vector<2x8x32xf32>
    %cst_26 = arith.constant dense<0.000000e+00> : vector<2x32xf32>
    %56 = vector.multi_reduction <add>, %55, %cst_26 [1] : vector<2x8x32xf32> to vector<2x32xf32>
    %c0_27 = arith.constant 0 : index
    %c0_28 = arith.constant 0 : index
    %57 = vector.load %arg6[%c0_27, %c0_28] : memref<2x32xf32, #tpu.memory_space<vmem>>, vector<2x32xf32>
    tpu.vector_store %arg6[%c0_27, %c0_28], %56 {strides = array<i32>} : memref<2x32xf32, #tpu.memory_space<vmem>>, vector<2x32xf32>,
    return
  }
  func.func @transform_0(%arg0: i32) -> (i32, i32) {
    %c0_i32 = arith.constant 0 : i32
    %c0_i32_0 = arith.constant 0 : i32
    return %arg0, %c0_i32 : i32, i32
  }
  func.func @transform_1(%arg0: i32) -> (i32, i32, i32) {
    %c0_i32 = arith.constant 0 : i32
    %c0_i32_0 = arith.constant 0 : i32
    %c0_i32_1 = arith.constant 0 : i32
    return %arg0, %c0_i32, %c0_i32_0 : i32, i32, i32
  }
  func.func @transform_2(%arg0: i32) -> (i32, i32) {
    %c0_i32 = arith.constant 0 : i32
    %c0_i32_0 = arith.constant 0 : i32
    %c0_i32_1 = arith.constant 0 : i32
    return %c0_i32, %c0_i32_0 : i32, i32
  }
  func.func @transform_3(%arg0: i32) -> (i32, i32) {
    %c0_i32 = arith.constant 0 : i32
    %c0_i32_0 = arith.constant 0 : i32
    %c0_i32_1 = arith.constant 0 : i32
    return %c0_i32, %c0_i32_0 : i32, i32
  }
  func.func @transform_4(%arg0: i32) -> (i32, i32) {
    %c0_i32 = arith.constant 0 : i32
    %c0_i32_0 = arith.constant 0 : i32
    %c0_i32_1 = arith.constant 0 : i32
    return %c0_i32, %c0_i32_0 : i32, i32
  }
  func.func @transform_5(%arg0: i32) -> (i32, i32) {
    %c0_i32 = arith.constant 0 : i32
    %c0_i32_0 = arith.constant 0 : i32
    return %arg0, %c0_i32 : i32, i32
  }
}

</mosaic_0001>

<llo_original>
// kernel: tpu_custom_call.1
$region0: #{tpu_custom_call.1}
  #allocation0 [shape = 'u32[]', space=smem, size = 0x4, offset = 0x4, fixed_abs, tag = 'smem constant byte address 0x4 - core index']
  #allocation1 [shape = 'u32[144,128]{1,0:T(1,128)}', space=vmem, size = 0x12000, scoped, tag = 'internal scratch']
  %s0 = inlined_call_operand.vmem [shape: f32[16,32], index: 0, kind: input, shape index: {}]
  %s1 = inlined_call_operand.vmem [shape: f32[16,8,32], index: 1, kind: input, shape index: {}]
  %s2 = inlined_call_operand.vmem [shape: f32[160,32], index: 2, kind: input, shape index: {}]
  %s3 = inlined_call_operand.vmem [shape: f32[1,32], index: 3, kind: input, shape index: {}]
  %s4 = inlined_call_operand.vmem [shape: f32[1,32], index: 4, kind: input, shape index: {}]
  %s5 = inlined_call_operand.hbm [shape: f32[2,32], index: 5, kind: output, shape index: {}]
  %s6 = sld [smem:[#allocation0]]
  $region30: #{tpu_custom_call.1} parent=0
    _
  %s8 = ssub.s32 1, %s6
  %s9 = scalar_select 0, %s8, %s6
  $region1: #{tpu_custom_call.1} parent=0
    #allocation2 [shape = 'u8[1024]{0}', space=vmem, size = 0x400, scoped, tag = 'output window, operand 0, single buffered']
    #allocation3 [shape = 's32[1]{0}', space=sflag, size = 0x4, scoped, tag = 'scoped memory for tpu_custom_call.1']
    %10 = vsyncpa [#allocation3], 0
    // Predicated region
    $region2: #{tpu_custom_call.1} parent=1 // pred_check
      _
    $region3: #{tpu_custom_call.1} parent=1 // pred_check_branch
      %12 = sbr.rel (0) target = $region5
    $region4: #{tpu_custom_call.1} parent=1 // pred_region
      _
    $region5: #{tpu_custom_call.1} parent=1 // pred_fallthru
      _
    // Predicated region
    $region6: #{tpu_custom_call.1} parent=1 // pred_check
      _
    $region7: #{tpu_custom_call.1} parent=1 // pred_check_branch
      %14 = sbr.rel (0) target = $region9
    $region8: #{tpu_custom_call.1} parent=1 // pred_region
      _
    $region9: #{tpu_custom_call.1} parent=1 // pred_fallthru
      _
    // Predicated region
    $region10: #{tpu_custom_call.1} parent=1 // pred_check
      _
    $region11: #{tpu_custom_call.1} parent=1 // pred_check_branch
      %16 = sbr.rel (0) target = $region13
    $region12: #{tpu_custom_call.1} parent=1 // pred_region
      _
    $region13: #{tpu_custom_call.1} parent=1 // pred_fallthru
      _
    // Predicated region
    $region14: #{tpu_custom_call.1} parent=1 // pred_check
      _
    $region15: #{tpu_custom_call.1} parent=1 // pred_check_branch
      %18 = sbr.rel (0) target = $region17
    $region16: #{tpu_custom_call.1} parent=1 // pred_region
      _
    $region17: #{tpu_custom_call.1} parent=1 // pred_fallthru
      _
    // Predicated region
    $region18: #{tpu_custom_call.1} parent=1 // pred_check
      _
    $region19: #{tpu_custom_call.1} parent=1 // pred_check_branch
      %20 = sbr.rel (0) target = $region21
    $region20: #{tpu_custom_call.1} parent=1 // pred_region
      _
    $region21: #{tpu_custom_call.1} parent=1 // pred_fallthru
      _
    %v21 = vld [vmem:[%s0] sm:$0xff]
    %v22 = vld [vmem:[%s0 + $0x8] sm:$0xff]
    %v23 = vld [vmem:[%s1] sm:$0xff]
    %v24 = vld [vmem:[%s1 + $0x8] sm:$0xff]
    %v25 = vld [vmem:[%s1 + $0x10] sm:$0xff]
    %v26 = vld [vmem:[%s1 + $0x18] sm:$0xff]
    %v27 = vld [vmem:[%s1 + $0x20] sm:$0xff]
    %v28 = vld [vmem:[%s1 + $0x28] sm:$0xff]
    %v29 = vld [vmem:[%s1 + $0x30] sm:$0xff]
    %v30 = vld [vmem:[%s1 + $0x38] sm:$0xff]
    %v31 = vld [vmem:[%s1 + $0x40] sm:$0xff]
    %v32 = vld [vmem:[%s1 + $0x48] sm:$0xff]
    %v33 = vld [vmem:[%s1 + $0x50] sm:$0xff]
    %v34 = vld [vmem:[%s1 + $0x58] sm:$0xff]
    %v35 = vld [vmem:[%s1 + $0x60] sm:$0xff]
    %v36 = vld [vmem:[%s1 + $0x68] sm:$0xff]
    %v37 = vld [vmem:[%s1 + $0x70] sm:$0xff]
    %v38 = vld [vmem:[%s1 + $0x78] sm:$0xff]
    %v39 = vld [vmem:[%s3] sm:$0x1]
    %v40 = vld [vmem:[%s4] sm:$0x1]
    %v41 = vld [vmem:[%s2] sm:$0xff]
    %v42 = vld [vmem:[%s2 + $0x8] sm:$0xff]
    %v43 = vld [vmem:[%s2 + $0x10] sm:$0xff]
    %v44 = vld [vmem:[%s2 + $0x18] sm:$0xff]
    %v45 = vld [vmem:[%s2 + $0x20] sm:$0xff]
    %v46 = vld [vmem:[%s2 + $0x28] sm:$0xff]
    %v47 = vld [vmem:[%s2 + $0x30] sm:$0xff]
    %v48 = vld [vmem:[%s2 + $0x38] sm:$0xff]
    %v49 = vld [vmem:[%s2 + $0x40] sm:$0xff]
    %v50 = vld [vmem:[%s2 + $0x48] sm:$0xff]
    %v51 = vld [vmem:[%s2 + $0x50] sm:$0xff]
    %v52 = vld [vmem:[%s2 + $0x58] sm:$0xff]
    %v53 = vld [vmem:[%s2 + $0x60] sm:$0xff]
    %v54 = vld [vmem:[%s2 + $0x68] sm:$0xff]
    %v55 = vld [vmem:[%s2 + $0x70] sm:$0xff]
    %v56 = vld [vmem:[%s2 + $0x78] sm:$0xff]
    %v57 = vld [vmem:[%s2 + $0x80] sm:$0xff]
    %v58 = vld [vmem:[%s2 + $0x88] sm:$0xff]
    %v59 = vld [vmem:[%s2 + $0x90] sm:$0xff]
    %v60 = vld [vmem:[%s2 + $0x98] sm:$0xff]
    %vm61 = vcmask 261120
    %v63 = vsel %vm61, %v21, 0
    %v66 = vsel %vm61, %v22, 0
    %68 = vmatprep.subr.mxu0 0.0
    %v69 = vand.u32 %v41, 4294901760
    %70 = vmatpush1.msra.mxu0 %v69
    %71 = vmatprep.subr.mxu0 0.0
    %v72 = vand.u32 %v42, 4294901760
    %73 = vmatpush1.msra.mxu0 %v72
    %74 = vmatprep.subr.mxu0 0.0
    %v75 = vand.u32 %v43, 4294901760
    %76 = vmatpush1.msra.mxu0 %v75
    %77 = vmatprep.subr.mxu0 0.0
    %v78 = vand.u32 %v44, 4294901760
    %79 = vmatpush1.msra.mxu0 %v78
    %80 = vmatprep.subr.mxu0 0.0
    %81 = vmatpush1.msra.mxu0 0.0
    %82 = vmatprep.subr.mxu0 0.0
    %83 = vmatpush1.msra.mxu0 0.0
    %84 = vmatprep.subr.mxu0 0.0
    %85 = vmatpush1.msra.mxu0 0.0
    %86 = vmatprep.subr.mxu0 0.0
    %87 = vmatpush1.msra.mxu0 0.0
    %88 = vmatprep.subr.mxu0 0.0
    %89 = vmatpush1.msra.mxu0 0.0
    %90 = vmatprep.subr.mxu0 0.0
    %91 = vmatpush1.msra.mxu0 0.0
    %92 = vmatprep.subr.mxu0 0.0
    %93 = vmatpush1.msra.mxu0 0.0
    %94 = vmatprep.subr.mxu0 0.0
    %95 = vmatpush1.msra.mxu0 0.0
    %96 = vmatprep.subr.mxu0 0.0
    %97 = vmatpush1.msra.mxu0 0.0
    %98 = vmatprep.subr.mxu0 0.0
    %99 = vmatpush1.msra.mxu0 0.0
    %100 = vmatprep.subr.mxu0 0.0
    %101 = vmatpush1.msra.mxu0 0.0
    %102 = vmatprep.subr.mxu0 0.0
    %103 = vmatpush1.msra.mxu0 0.0
    %104 = vmatprep.subr.mxu0 0.0
    %105 = vmatpush1.msra.mxu0 0.0
    %106 = vmatprep.subr.mxu0 0.0
    %107 = vmatpush1.msra.mxu0 0.0
    %108 = vmatprep.subr.mxu0 0.0
    %109 = vmatpush1.msra.mxu0 0.0
    %110 = vmatprep.subr.mxu0 0.0
    %111 = vmatpush1.msra.mxu0 0.0
    %112 = vmatprep.subr.mxu0 0.0
    %113 = vmatpush1.msra.mxu0 0.0
    %114 = vmatprep.subr.mxu0 0.0
    %115 = vmatpush1.msra.mxu0 0.0
    %116 = vmatprep.subr.mxu0 0.0
    %117 = vmatpush1.msra.mxu0 0.0
    %118 = vmatprep.subr.mxu0 0.0
    %119 = vmatpush1.msra.mxu0 0.0
    %120 = vmatprep.subr.mxu0 0.0
    %121 = vmatpush1.msra.mxu0 0.0
    %122 = vmatprep.subr.mxu0 0.0
    %123 = vmatpush1.msra.mxu0 0.0
    %124 = vmatprep.subr.mxu0 0.0
    %125 = vmatpush1.msra.mxu0 0.0
    %126 = vmatprep.subr.mxu0 0.0
    %127 = vmatpush1.msra.mxu0 0.0
    %128 = vmatprep.subr.mxu0 0.0
    %129 = vmatpush1.msra.mxu0 0.0
    %130 = vmatprep.subr.mxu0 0.0
    %131 = vmatpush1.msra.mxu0 0.0
    %132 = vmatprep.subr.mxu0 0.0
    %133 = vmatpush1.msra.mxu0 0.0
    %134 = vmatprep.subr.mxu0 0.0
    %135 = vmatpush1.msra.mxu0 0.0
    %136 = vmatprep.mubr.f32.mxu0 0.0
    %v137 = vand.u32 %v63, 4294901760
    %v138 = vsub.f32 %v63, %v137
    %v139 = vand.u32 %v138, 4294901760
    %v140 = vsub.f32 %v138, %v139
    %v141 = vand.u32 %v140, 4294901760
    %142 = vmatmul.mubr.f32.gmra.mrb[0].mxu0 %v141
    %v143 = vpop.f32.mrb[0].mxu0
    %v144 = vadd.f32 0.0, %v143
    %v145 = vpop.f32.mrb[0].mxu0
    %146 = vmatprep.mubr.f32.mxu0 0.0
    %v147 = vand.u32 %v66, 4294901760
    %v148 = vsub.f32 %v66, %v147
    %v149 = vand.u32 %v148, 4294901760
    %v150 = vsub.f32 %v148, %v149
    %v151 = vand.u32 %v150, 4294901760
    %152 = vmatmul.mubr.f32.gmra.mrb[0].mxu0 %v151
    %v153 = vpop.f32.mrb[0].mxu0
    %v154 = vadd.f32 0.0, %v153
    %v155 = vpop.f32.mrb[0].mxu0
    %156 = vdwg.mxu0
    %157 = vmatprep.subr.mxu0 0.0
    %v158 = vand.u32 %v41, 4294901760
    %v159 = vsub.f32 %v41, %v158
    %v160 = vand.u32 %v159, 4294901760
    %v161 = vsub.f32 %v159, %v160
    %v162 = vand.u32 %v161, 4294901760
    %163 = vmatpush1.msra.mxu0 %v162
    %164 = vmatprep.subr.mxu0 0.0
    %v165 = vand.u32 %v42, 4294901760
    %v166 = vsub.f32 %v42, %v165
    %v167 = vand.u32 %v166, 4294901760
    %v168 = vsub.f32 %v166, %v167
    %v169 = vand.u32 %v168, 4294901760
    %170 = vmatpush1.msra.mxu0 %v169
    %171 = vmatprep.subr.mxu0 0.0
    %v172 = vand.u32 %v43, 4294901760
    %v173 = vsub.f32 %v43, %v172
    %v174 = vand.u32 %v173, 4294901760
    %v175 = vsub.f32 %v173, %v174
    %v176 = vand.u32 %v175, 4294901760
    %177 = vmatpush1.msra.mxu0 %v176
    %178 = vmatprep.subr.mxu0 0.0
    %v179 = vand.u32 %v44, 4294901760
    %v180 = vsub.f32 %v44, %v179
    %v181 = vand.u32 %v180, 4294901760
    %v182 = vsub.f32 %v180, %v181
    %v183 = vand.u32 %v182, 4294901760
    %184 = vmatpush1.msra.mxu0 %v183
    %185 = vmatprep.subr.mxu0 0.0
    %186 = vmatpush1.msra.mxu0 0.0
    %187 = vmatprep.subr.mxu0 0.0
    %188 = vmatpush1.msra.mxu0 0.0
    %189 = vmatprep.subr.mxu0 0.0
    %190 = vmatpush1.msra.mxu0 0.0
    %191 = vmatprep.subr.mxu0 0.0
    %192 = vmatpush1.msra.mxu0 0.0
    %193 = vmatprep.subr.mxu0 0.0
    %194 = vmatpush1.msra.mxu0 0.0
    %195 = vmatprep.subr.mxu0 0.0
    %196 = vmatpush1.msra.mxu0 0.0
    %197 = vmatprep.subr.mxu0 0.0
    %198 = vmatpush1.msra.mxu0 0.0
    %199 = vmatprep.subr.mxu0 0.0
    %200 = vmatpush1.msra.mxu0 0.0
    %201 = vmatprep.subr.mxu0 0.0
    %202 = vmatpush1.msra.mxu0 0.0
    %203 = vmatprep.subr.mxu0 0.0
    %204 = vmatpush1.msra.mxu0 0.0
    %205 = vmatprep.subr.mxu0 0.0
    %206 = vmatpush1.msra.mxu0 0.0
    %207 = vmatprep.subr.mxu0 0.0
    %208 = vmatpush1.msra.mxu0 0.0
    %209 = vmatprep.subr.mxu0 0.0
    %210 = vmatpush1.msra.mxu0 0.0
    %211 = vmatprep.subr.mxu0 0.0
    %212 = vmatpush1.msra.mxu0 0.0
    %213 = vmatprep.subr.mxu0 0.0
    %214 = vmatpush1.msra.mxu0 0.0
    %215 = vmatprep.subr.mxu0 0.0
    %216 = vmatpush1.msra.mxu0 0.0
    %217 = vmatprep.subr.mxu0 0.0
    %218 = vmatpush1.msra.mxu0 0.0
    %219 = vmatprep.subr.mxu0 0.0
    %220 = vmatpush1.msra.mxu0 0.0
    %221 = vmatprep.subr.mxu0 0.0
    %222 = vmatpush1.msra.mxu0 0.0
    %223 = vmatprep.subr.mxu0 0.0
    %224 = vmatpush1.msra.mxu0 0.0
    %225 = vmatprep.subr.mxu0 0.0
    %226 = vmatpush1.msra.mxu0 0.0
    %227 = vmatprep.subr.mxu0 0.0
    %228 = vmatpush1.msra.mxu0 0.0
    %229 = vmatprep.subr.mxu0 0.0
    %230 = vmatpush1.msra.mxu0 0.0
    %231 = vmatprep.subr.mxu0 0.0
    %232 = vmatpush1.msra.mxu0 0.0
    %233 = vmatprep.subr.mxu0 0.0
    %234 = vmatpush1.msra.mxu0 0.0
    %235 = vmatprep.subr.mxu0 0.0
    %236 = vmatpush1.msra.mxu0 0.0
    %237 = vmatprep.subr.mxu0 0.0
    %238 = vmatpush1.msra.mxu0 0.0
    %239 = vmatprep.subr.mxu0 0.0
    %240 = vmatpush1.msra.mxu0 0.0
    %241 = vmatprep.mubr.f32.mxu0 0.0
    %v242 = vand.u32 %v63, 4294901760
    %243 = vmatmul.mubr.f32.gmra.mrb[0].mxu0 %v242
    %v244 = vpop.f32.mrb[0].mxu0
    %v245 = vadd.f32 %v144, %v244
    %v246 = vpop.f32.mrb[0].mxu0
    %247 = vmatprep.mubr.f32.mxu0 0.0
    %v248 = vand.u32 %v66, 4294901760
    %249 = vmatmul.mubr.f32.gmra.mrb[0].mxu0 %v248
    %v250 = vpop.f32.mrb[0].mxu0
    %v251 = vadd.f32 %v154, %v250
    %v252 = vpop.f32.mrb[0].mxu0
    %253 = vdwg.mxu0
    %254 = vmatprep.subr.mxu0 0.0
    %v255 = vand.u32 %v41, 4294901760
    %v256 = vsub.f32 %v41, %v255
    %257 = vmatpush1.msra.mxu0 %v256
    %258 = vmatprep.subr.mxu0 0.0
    %v259 = vand.u32 %v42, 4294901760
    %v260 = vsub.f32 %v42, %v259
    %261 = vmatpush1.msra.mxu0 %v260
    %262 = vmatprep.subr.mxu0 0.0
    %v263 = vand.u32 %v43, 4294901760
    %v264 = vsub.f32 %v43, %v263
    %265 = vmatpush1.msra.mxu0 %v264
    %266 = vmatprep.subr.mxu0 0.0
    %v267 = vand.u32 %v44, 4294901760
    %v268 = vsub.f32 %v44, %v267
    %269 = vmatpush1.msra.mxu0 %v268
    %270 = vmatprep.subr.mxu0 0.0
    %271 = vmatpush1.msra.mxu0 0.0
    %272 = vmatprep.subr.mxu0 0.0
    %273 = vmatpush1.msra.mxu0 0.0
    %274 = vmatprep.subr.mxu0 0.0
    %275 = vmatpush1.msra.mxu0 0.0
    %276 = vmatprep.subr.mxu0 0.0
    %277 = vmatpush1.msra.mxu0 0.0
    %278 = vmatprep.subr.mxu0 0.0
    %279 = vmatpush1.msra.mxu0 0.0
    %280 = vmatprep.subr.mxu0 0.0
    %281 = vmatpush1.msra.mxu0 0.0
    %282 = vmatprep.subr.mxu0 0.0
    %283 = vmatpush1.msra.mxu0 0.0
    %284 = vmatprep.subr.mxu0 0.0
    %285 = vmatpush1.msra.mxu0 0.0
    %286 = vmatprep.subr.mxu0 0.0
    %287 = vmatpush1.msra.mxu0 0.0
    %288 = vmatprep.subr.mxu0 0.0
    %289 = vmatpush1.msra.mxu0 0.0
    %290 = vmatprep.subr.mxu0 0.0
    %291 = vmatpush1.msra.mxu0 0.0
    %292 = vmatprep.subr.mxu0 0.0
    %293 = vmatpush1.msra.mxu0 0.0
    %294 = vmatprep.subr.mxu0 0.0
    %295 = vmatpush1.msra.mxu0 0.0
    %296 = vmatprep.subr.mxu0 0.0
    %297 = vmatpush1.msra.mxu0 0.0
    %298 = vmatprep.subr.mxu0 0.0
    %299 = vmatpush1.msra.mxu0 0.0
    %300 = vmatprep.subr.mxu0 0.0
    %301 = vmatpush1.msra.mxu0 0.0
    %302 = vmatprep.subr.mxu0 0.0
    %303 = vmatpush1.msra.mxu0 0.0
    %304 = vmatprep.subr.mxu0 0.0
    %305 = vmatpush1.msra.mxu0 0.0
    %306 = vmatprep.subr.mxu0 0.0
    %307 = vmatpush1.msra.mxu0 0.0
    %308 = vmatprep.subr.mxu0 0.0
    %309 = vmatpush1.msra.mxu0 0.0
    %310 = vmatprep.subr.mxu0 0.0
    %311 = vmatpush1.msra.mxu0 0.0
    %312 = vmatprep.subr.mxu0 0.0
    %313 = vmatpush1.msra.mxu0 0.0
    %314 = vmatprep.subr.mxu0 0.0
    %315 = vmatpush1.msra.mxu0 0.0
    %316 = vmatprep.subr.mxu0 0.0
    %317 = vmatpush1.msra.mxu0 0.0
    %318 = vmatprep.subr.mxu0 0.0
    %319 = vmatpush1.msra.mxu0 0.0
    %320 = vmatprep.subr.mxu0 0.0
    %321 = vmatpush1.msra.mxu0 0.0
    %322 = vmatprep.subr.mxu0 0.0
    %323 = vmatpush1.msra.mxu0 0.0
    %324 = vmatprep.subr.mxu0 0.0
    %325 = vmatpush1.msra.mxu0 0.0
    %326 = vmatprep.mubr.f32.mxu0 0.0
    %v327 = vand.u32 %v63, 4294901760
    %v328 = vsub.f32 %v63, %v327
    %329 = vmatmul.mubr.f32.gmra.mrb[0].mxu0 %v328
    %v330 = vpop.f32.mrb[0].mxu0
    %v331 = vadd.f32 %v245, %v330
    %v332 = vpop.f32.mrb[0].mxu0
    %333 = vmatprep.mubr.f32.mxu0 0.0
    %v334 = vand.u32 %v66, 4294901760
    %v335 = vsub.f32 %v66, %v334
    %336 = vmatmul.mubr.f32.gmra.mrb[0].mxu0 %v335
    %v337 = vpop.f32.mrb[0].mxu0
    %v338 = vadd.f32 %v251, %v337
    %v339 = vpop.f32.mrb[0].mxu0
    %340 = vdwg.mxu0
    %341 = vmatprep.subr.mxu0 0.0
    %v342 = vand.u32 %v41, 4294901760
    %343 = vmatpush1.msra.mxu0 %v342
    %344 = vmatprep.subr.mxu0 0.0
    %v345 = vand.u32 %v42, 4294901760
    %346 = vmatpush1.msra.mxu0 %v345
    %347 = vmatprep.subr.mxu0 0.0
    %v348 = vand.u32 %v43, 4294901760
    %349 = vmatpush1.msra.mxu0 %v348
    %350 = vmatprep.subr.mxu0 0.0
    %v351 = vand.u32 %v44, 4294901760
    %352 = vmatpush1.msra.mxu0 %v351
    %353 = vmatprep.subr.mxu0 0.0
    %354 = vmatpush1.msra.mxu0 0.0
    %355 = vmatprep.subr.mxu0 0.0
    %356 = vmatpush1.msra.mxu0 0.0
    %357 = vmatprep.subr.mxu0 0.0
    %358 = vmatpush1.msra.mxu0 0.0
    %359 = vmatprep.subr.mxu0 0.0
    %360 = vmatpush1.msra.mxu0 0.0
    %361 = vmatprep.subr.mxu0 0.0
    %362 = vmatpush1.msra.mxu0 0.0
    %363 = vmatprep.subr.mxu0 0.0
    %364 = vmatpush1.msra.mxu0 0.0
    %365 = vmatprep.subr.mxu0 0.0
    %366 = vmatpush1.msra.mxu0 0.0
    %367 = vmatprep.subr.mxu0 0.0
    %368 = vmatpush1.msra.mxu0 0.0
    %369 = vmatprep.subr.mxu0 0.0
    %370 = vmatpush1.msra.mxu0 0.0
    %371 = vmatprep.subr.mxu0 0.0
    %372 = vmatpush1.msra.mxu0 0.0
    %373 = vmatprep.subr.mxu0 0.0
    %374 = vmatpush1.msra.mxu0 0.0
    %375 = vmatprep.subr.mxu0 0.0
    %376 = vmatpush1.msra.mxu0 0.0
    %377 = vmatprep.subr.mxu0 0.0
    %378 = vmatpush1.msra.mxu0 0.0
    %379 = vmatprep.subr.mxu0 0.0
    %380 = vmatpush1.msra.mxu0 0.0
    %381 = vmatprep.subr.mxu0 0.0
    %382 = vmatpush1.msra.mxu0 0.0
    %383 = vmatprep.subr.mxu0 0.0
    %384 = vmatpush1.msra.mxu0 0.0
    %385 = vmatprep.subr.mxu0 0.0
    %386 = vmatpush1.msra.mxu0 0.0
    %387 = vmatprep.subr.mxu0 0.0
    %388 = vmatpush1.msra.mxu0 0.0
    %389 = vmatprep.subr.mxu0 0.0
    %390 = vmatpush1.msra.mxu0 0.0
    %391 = vmatprep.subr.mxu0 0.0
    %392 = vmatpush1.msra.mxu0 0.0
    %393 = vmatprep.subr.mxu0 0.0
    %394 = vmatpush1.msra.mxu0 0.0
    %395 = vmatprep.subr.mxu0 0.0
    %396 = vmatpush1.msra.mxu0 0.0
    %397 = vmatprep.subr.mxu0 0.0
    %398 = vmatpush1.msra.mxu0 0.0
    %399 = vmatprep.subr.mxu0 0.0
    %400 = vmatpush1.msra.mxu0 0.0
    %401 = vmatprep.subr.mxu0 0.0
    %402 = vmatpush1.msra.mxu0 0.0
    %403 = vmatprep.subr.mxu0 0.0
    %404 = vmatpush1.msra.mxu0 0.0
    %405 = vmatprep.subr.mxu0 0.0
    %406 = vmatpush1.msra.mxu0 0.0
    %407 = vmatprep.subr.mxu0 0.0
    %408 = vmatpush1.msra.mxu0 0.0
    %409 = vmatprep.mubr.f32.mxu0 0.0
    %v410 = vand.u32 %v63, 4294901760
    %v411 = vsub.f32 %v63, %v410
    %v412 = vand.u32 %v411, 4294901760
    %413 = vmatmul.mubr.f32.gmra.mrb[0].mxu0 %v412
    %v414 = vpop.f32.mrb[0].mxu0
    %v415 = vadd.f32 %v331, %v414
    %v416 = vpop.f32.mrb[0].mxu0
    %417 = vmatprep.mubr.f32.mxu0 0.0
    %v418 = vand.u32 %v66, 4294901760
    %v419 = vsub.f32 %v66, %v418
    %v420 = vand.u32 %v419, 4294901760
    %421 = vmatmul.mubr.f32.gmra.mrb[0].mxu0 %v420
    %v422 = vpop.f32.mrb[0].mxu0
    %v423 = vadd.f32 %v338, %v422
    %v424 = vpop.f32.mrb[0].mxu0
    %425 = vdwg.mxu0
    %426 = vmatprep.subr.mxu0 0.0
    %v427 = vand.u32 %v41, 4294901760
    %v428 = vsub.f32 %v41, %v427
    %v429 = vand.u32 %v428, 4294901760
    %430 = vmatpush1.msra.mxu0 %v429
    %431 = vmatprep.subr.mxu0 0.0
    %v432 = vand.u32 %v42, 4294901760
    %v433 = vsub.f32 %v42, %v432
    %v434 = vand.u32 %v433, 4294901760
    %435 = vmatpush1.msra.mxu0 %v434
    %436 = vmatprep.subr.mxu0 0.0
    %v437 = vand.u32 %v43, 4294901760
    %v438 = vsub.f32 %v43, %v437
    %v439 = vand.u32 %v438, 4294901760
    %440 = vmatpush1.msra.mxu0 %v439
    %441 = vmatprep.subr.mxu0 0.0
    %v442 = vand.u32 %v44, 4294901760
    %v443 = vsub.f32 %v44, %v442
    %v444 = vand.u32 %v443, 4294901760
    %445 = vmatpush1.msra.mxu0 %v444
    %446 = vmatprep.subr.mxu0 0.0
    %447 = vmatpush1.msra.mxu0 0.0
    %448 = vmatprep.subr.mxu0 0.0
    %449 = vmatpush1.msra.mxu0 0.0
    %450 = vmatprep.subr.mxu0 0.0
    %451 = vmatpush1.msra.mxu0 0.0
    %452 = vmatprep.subr.mxu0 0.0
    %453 = vmatpush1.msra.mxu0 0.0
    %454 = vmatprep.subr.mxu0 0.0
    %455 = vmatpush1.msra.mxu0 0.0
    %456 = vmatprep.subr.mxu0 0.0
    %457 = vmatpush1.msra.mxu0 0.0
    %458 = vmatprep.subr.mxu0 0.0
    %459 = vmatpush1.msra.mxu0 0.0
    %460 = vmatprep.subr.mxu0 0.0
    %461 = vmatpush1.msra.mxu0 0.0
    %462 = vmatprep.subr.mxu0 0.0
    %463 = vmatpush1.msra.mxu0 0.0
    %464 = vmatprep.subr.mxu0 0.0
    %465 = vmatpush1.msra.mxu0 0.0
    %466 = vmatprep.subr.mxu0 0.0
    %467 = vmatpush1.msra.mxu0 0.0
    %468 = vmatprep.subr.mxu0 0.0
    %469 = vmatpush1.msra.mxu0 0.0
    %470 = vmatprep.subr.mxu0 0.0
    %471 = vmatpush1.msra.mxu0 0.0
    %472 = vmatprep.subr.mxu0 0.0
    %473 = vmatpush1.msra.mxu0 0.0
    %474 = vmatprep.subr.mxu0 0.0
    %475 = vmatpush1.msra.mxu0 0.0
    %476 = vmatprep.subr.mxu0 0.0
    %477 = vmatpush1.msra.mxu0 0.0
    %478 = vmatprep.subr.mxu0 0.0
    %479 = vmatpush1.msra.mxu0 0.0
    %480 = vmatprep.subr.mxu0 0.0
    %481 = vmatpush1.msra.mxu0 0.0
    %482 = vmatprep.subr.mxu0 0.0
    %483 = vmatpush1.msra.mxu0 0.0
    %484 = vmatprep.subr.mxu0 0.0
    %485 = vmatpush1.msra.mxu0 0.0
    %486 = vmatprep.subr.mxu0 0.0
    %487 = vmatpush1.msra.mxu0 0.0
    %488 = vmatprep.subr.mxu0 0.0
    %489 = vmatpush1.msra.mxu0 0.0
    %490 = vmatprep.subr.mxu0 0.0
    %491 = vmatpush1.msra.mxu0 0.0
    %492 = vmatprep.subr.mxu0 0.0
    %493 = vmatpush1.msra.mxu0 0.0
    %494 = vmatprep.subr.mxu0 0.0
    %495 = vmatpush1.msra.mxu0 0.0
    %496 = vmatprep.subr.mxu0 0.0
    %497 = vmatpush1.msra.mxu0 0.0
    %498 = vmatprep.subr.mxu0 0.0
    %499 = vmatpush1.msra.mxu0 0.0
    %500 = vmatprep.subr.mxu0 0.0
    %501 = vmatpush1.msra.mxu0 0.0
    %502 = vmatprep.mubr.f32.mxu0 0.0
    %v503 = vand.u32 %v63, 4294901760
    %504 = vmatmul.mubr.f32.gmra.mrb[0].mxu0 %v503
    %v505 = vpop.f32.mrb[0].mxu0
    %v506 = vadd.f32 %v415, %v505
    %v507 = vpop.f32.mrb[0].mxu0
    %508 = vmatprep.mubr.f32.mxu0 0.0
    %v509 = vand.u32 %v66, 4294901760
    %510 = vmatmul.mubr.f32.gmra.mrb[0].mxu0 %v509
    %v511 = vpop.f32.mrb[0].mxu0
    %v512 = vadd.f32 %v423, %v511
    %v513 = vpop.f32.mrb[0].mxu0
    %514 = vdwg.mxu0
    %515 = vmatprep.subr.mxu0 0.0
    %v516 = vand.u32 %v41, 4294901760
    %517 = vmatpush1.msra.mxu0 %v516
    %518 = vmatprep.subr.mxu0 0.0
    %v519 = vand.u32 %v42, 4294901760
    %520 = vmatpush1.msra.mxu0 %v519
    %521 = vmatprep.subr.mxu0 0.0
    %v522 = vand.u32 %v43, 4294901760
    %523 = vmatpush1.msra.mxu0 %v522
    %524 = vmatprep.subr.mxu0 0.0
    %v525 = vand.u32 %v44, 4294901760
    %526 = vmatpush1.msra.mxu0 %v525
    %527 = vmatprep.subr.mxu0 0.0
    %528 = vmatpush1.msra.mxu0 0.0
    %529 = vmatprep.subr.mxu0 0.0
    %530 = vmatpush1.msra.mxu0 0.0
    %531 = vmatprep.subr.mxu0 0.0
    %532 = vmatpush1.msra.mxu0 0.0
    %533 = vmatprep.subr.mxu0 0.0
    %534 = vmatpush1.msra.mxu0 0.0
    %535 = vmatprep.subr.mxu0 0.0
    %536 = vmatpush1.msra.mxu0 0.0
    %537 = vmatprep.subr.mxu0 0.0
    %538 = vmatpush1.msra.mxu0 0.0
    %539 = vmatprep.subr.mxu0 0.0
    %540 = vmatpush1.msra.mxu0 0.0
    %541 = vmatprep.subr.mxu0 0.0
    %542 = vmatpush1.msra.mxu0 0.0
    %543 = vmatprep.subr.mxu0 0.0
    %544 = vmatpush1.msra.mxu0 0.0
    %545 = vmatprep.subr.mxu0 0.0
    %546 = vmatpush1.msra.mxu0 0.0
    %547 = vmatprep.subr.mxu0 0.0
    %548 = vmatpush1.msra.mxu0 0.0
    %549 = vmatprep.subr.mxu0 0.0
    %550 = vmatpush1.msra.mxu0 0.0
    %551 = vmatprep.subr.mxu0 0.0
    %552 = vmatpush1.msra.mxu0 0.0
    %553 = vmatprep.subr.mxu0 0.0
    %554 = vmatpush1.msra.mxu0 0.0
    %555 = vmatprep.subr.mxu0 0.0
    %556 = vmatpush1.msra.mxu0 0.0
    %557 = vmatprep.subr.mxu0 0.0
    %558 = vmatpush1.msra.mxu0 0.0
    %559 = vmatprep.subr.mxu0 0.0
    %560 = vmatpush1.msra.mxu0 0.0
    %561 = vmatprep.subr.mxu0 0.0
    %562 = vmatpush1.msra.mxu0 0.0
    %563 = vmatprep.subr.mxu0 0.0
    %564 = vmatpush1.msra.mxu0 0.0
    %565 = vmatprep.subr.mxu0 0.0
    %566 = vmatpush1.msra.mxu0 0.0
    %567 = vmatprep.subr.mxu0 0.0
    %568 = vmatpush1.msra.mxu0 0.0
    %569 = vmatprep.subr.mxu0 0.0
    %570 = vmatpush1.msra.mxu0 0.0
    %571 = vmatprep.subr.mxu0 0.0
    %572 = vmatpush1.msra.mxu0 0.0
    %573 = vmatprep.subr.mxu0 0.0
    %574 = vmatpush1.msra.mxu0 0.0
    %575 = vmatprep.subr.mxu0 0.0
    %576 = vmatpush1.msra.mxu0 0.0
    %577 = vmatprep.subr.mxu0 0.0
    %578 = vmatpush1.msra.mxu0 0.0
    %579 = vmatprep.subr.mxu0 0.0
    %580 = vmatpush1.msra.mxu0 0.0
    %581 = vmatprep.subr.mxu0 0.0
    %582 = vmatpush1.msra.mxu0 0.0
    %583 = vmatprep.mubr.f32.mxu0 0.0
    %v584 = vand.u32 %v63, 4294901760
    %585 = vmatmul.mubr.f32.gmra.mrb[0].mxu0 %v584
    %v586 = vpop.f32.mrb[0].mxu0
    %v587 = vadd.f32 %v506, %v586
    %v588 = vpop.f32.mrb[0].mxu0
    %589 = vmatprep.mubr.f32.mxu0 0.0
    %v590 = vand.u32 %v66, 4294901760
    %591 = vmatmul.mubr.f32.gmra.mrb[0].mxu0 %v590
    %v592 = vpop.f32.mrb[0].mxu0
    %v593 = vadd.f32 %v512, %v592
    %v594 = vpop.f32.mrb[0].mxu0
    %595 = vdwg.mxu0
    %v598 = vcombine.high %v587, %v587
    %v600 = vunpack.c.l.s4 1966171168
    %v601 = vunpack.c.0.s8 %v600
    %v602 = vlaneseq
    %v603 = vshrl.u32 %v602, 7
    %v604 = vsub.s32 %v601, %v603
    %v605 = vrot.slane %v587, %v604
    %v607 = vunpack.c.l.s4 1966171168
    %v608 = vunpack.c.0.s8 %v607
    %v609 = vlaneseq
    %v610 = vshrl.u32 %v609, 7
    %v611 = vsub.s32 %v608, %v610
    %v612 = vrot.slane %v598, %v611
    %v613 = vcombine.high %v605, %v605
    %v614 = vcombine.high %v612, %v612
    %v616 = vunpack.c.l.s4 1966171168
    %v617 = vunpack.c.0.s8 %v616
    %v618 = vlaneseq
    %v619 = vshrl.u32 %v618, 7
    %v620 = vsub.s32 %v617, %v619
    %v621 = vrot.slane %v605, %v620
    %v623 = vunpack.c.l.s4 1966171168
    %v624 = vunpack.c.0.s8 %v623
    %v625 = vlaneseq
    %v626 = vshrl.u32 %v625, 7
    %v627 = vsub.s32 %v624, %v626
    %v628 = vrot.slane %v612, %v627
    %v630 = vunpack.c.l.s4 1966171168
    %v631 = vunpack.c.0.s8 %v630
    %v632 = vlaneseq
    %v633 = vshrl.u32 %v632, 7
    %v634 = vsub.s32 %v631, %v633
    %v635 = vrot.slane %v613, %v634
    %v637 = vunpack.c.l.s4 1966171168
    %v638 = vunpack.c.0.s8 %v637
    %v639 = vlaneseq
    %v640 = vshrl.u32 %v639, 7
    %v641 = vsub.s32 %v638, %v640
    %v642 = vrot.slane %v614, %v641
    %v643 = vcombine.high %v621, %v621
    %v644 = vcombine.high %v628, %v628
    %v645 = vcombine.high %v635, %v635
    %v646 = vcombine.high %v642, %v642
    %v647 = vcombine.high %v593, %v593
    %v649 = vunpack.c.l.s4 1966171168
    %v650 = vunpack.c.0.s8 %v649
    %v651 = vlaneseq
    %v652 = vshrl.u32 %v651, 7
    %v653 = vsub.s32 %v650, %v652
    %v654 = vrot.slane %v593, %v653
    %v656 = vunpack.c.l.s4 1966171168
    %v657 = vunpack.c.0.s8 %v656
    %v658 = vlaneseq
    %v659 = vshrl.u32 %v658, 7
    %v660 = vsub.s32 %v657, %v659
    %v661 = vrot.slane %v647, %v660
    %v662 = vcombine.high %v654, %v654
    %v663 = vcombine.high %v661, %v661
    %v665 = vunpack.c.l.s4 1966171168
    %v666 = vunpack.c.0.s8 %v665
    %v667 = vlaneseq
    %v668 = vshrl.u32 %v667, 7
    %v669 = vsub.s32 %v666, %v668
    %v670 = vrot.slane %v654, %v669
    %v672 = vunpack.c.l.s4 1966171168
    %v673 = vunpack.c.0.s8 %v672
    %v674 = vlaneseq
    %v675 = vshrl.u32 %v674, 7
    %v676 = vsub.s32 %v673, %v675
    %v677 = vrot.slane %v661, %v676
    %v679 = vunpack.c.l.s4 1966171168
    %v680 = vunpack.c.0.s8 %v679
    %v681 = vlaneseq
    %v682 = vshrl.u32 %v681, 7
    %v683 = vsub.s32 %v680, %v682
    %v684 = vrot.slane %v662, %v683
    %v686 = vunpack.c.l.s4 1966171168
    %v687 = vunpack.c.0.s8 %v686
    %v688 = vlaneseq
    %v689 = vshrl.u32 %v688, 7
    %v690 = vsub.s32 %v687, %v689
    %v691 = vrot.slane %v663, %v690
    %v692 = vcombine.high %v670, %v670
    %v693 = vcombine.high %v677, %v677
    %v694 = vcombine.high %v684, %v684
    %v695 = vcombine.high %v691, %v691
    %v696 = vlaneseq
    %v697 = vshrl.u32 %v696, 7
    %v698 = vsub.s32 0, %v697
    %v699 = vrot.slane %v621, %v698
    %v700 = vlaneseq
    %v701 = vshrl.u32 %v700, 7
    %v702 = vsub.s32 0, %v701
    %v703 = vrot.slane %v635, %v702
    %v704 = vlaneseq
    %v705 = vshrl.u32 %v704, 7
    %v706 = vsub.s32 0, %v705
    %v707 = vrot.slane %v643, %v706
    %v708 = vlaneseq
    %v709 = vshrl.u32 %v708, 7
    %v710 = vsub.s32 0, %v709
    %v711 = vrot.slane %v645, %v710
    %v712 = vlaneseq
    %v713 = vshrl.u32 %v712, 7
    %v714 = vsub.s32 0, %v713
    %v715 = vrot.slane %v628, %v714
    %v716 = vlaneseq
    %v717 = vshrl.u32 %v716, 7
    %v718 = vsub.s32 0, %v717
    %v719 = vrot.slane %v642, %v718
    %v720 = vlaneseq
    %v721 = vshrl.u32 %v720, 7
    %v722 = vsub.s32 0, %v721
    %v723 = vrot.slane %v644, %v722
    %v724 = vlaneseq
    %v725 = vshrl.u32 %v724, 7
    %v726 = vsub.s32 0, %v725
    %v727 = vrot.slane %v646, %v726
    %v728 = vlaneseq
    %v729 = vshrl.u32 %v728, 7
    %v730 = vsub.s32 0, %v729
    %v731 = vrot.slane %v670, %v730
    %v732 = vlaneseq
    %v733 = vshrl.u32 %v732, 7
    %v734 = vsub.s32 0, %v733
    %v735 = vrot.slane %v684, %v734
    %v736 = vlaneseq
    %v737 = vshrl.u32 %v736, 7
    %v738 = vsub.s32 0, %v737
    %v739 = vrot.slane %v692, %v738
    %v740 = vlaneseq
    %v741 = vshrl.u32 %v740, 7
    %v742 = vsub.s32 0, %v741
    %v743 = vrot.slane %v694, %v742
    %v744 = vlaneseq
    %v745 = vshrl.u32 %v744, 7
    %v746 = vsub.s32 0, %v745
    %v747 = vrot.slane %v677, %v746
    %v748 = vlaneseq
    %v749 = vshrl.u32 %v748, 7
    %v750 = vsub.s32 0, %v749
    %v751 = vrot.slane %v691, %v750
    %v752 = vlaneseq
    %v753 = vshrl.u32 %v752, 7
    %v754 = vsub.s32 0, %v753
    %v755 = vrot.slane %v693, %v754
    %v756 = vlaneseq
    %v757 = vshrl.u32 %v756, 7
    %v758 = vsub.s32 0, %v757
    %v759 = vrot.slane %v695, %v758
    %v776 = vmul.f32 %v23, %v699
    %v777 = vmul.f32 %v24, %v703
    %v778 = vmul.f32 %v25, %v707
    %v779 = vmul.f32 %v26, %v711
    %v780 = vmul.f32 %v27, %v715
    %v781 = vmul.f32 %v28, %v719
    %v782 = vmul.f32 %v29, %v723
    %v783 = vmul.f32 %v30, %v727
    %v784 = vmul.f32 %v31, %v731
    %v785 = vmul.f32 %v32, %v735
    %v786 = vmul.f32 %v33, %v739
    %v787 = vmul.f32 %v34, %v743
    %v788 = vmul.f32 %v35, %v747
    %v789 = vmul.f32 %v36, %v751
    %v790 = vmul.f32 %v37, %v755
    %v791 = vmul.f32 %v38, %v759
    %v792 = vsel %vm61, %v776, 0.0
    %793 = vadd.xlane.f32.xlu0 %v792
    %v794 = vpop.xlane.xlu0 %793
    %v795 = vsel %vm61, %v777, 0.0
    %796 = vadd.xlane.f32.xlu0 %v795
    %v797 = vpop.xlane.xlu0 %796
    %v798 = vsel %vm61, %v778, 0.0
    %799 = vadd.xlane.f32.xlu0 %v798
    %v800 = vpop.xlane.xlu0 %799
    %v801 = vsel %vm61, %v779, 0.0
    %802 = vadd.xlane.f32.xlu0 %v801
    %v803 = vpop.xlane.xlu0 %802
    %v804 = vsel %vm61, %v780, 0.0
    %805 = vadd.xlane.f32.xlu0 %v804
    %v806 = vpop.xlane.xlu0 %805
    %v807 = vsel %vm61, %v781, 0.0
    %808 = vadd.xlane.f32.xlu0 %v807
    %v809 = vpop.xlane.xlu0 %808
    %v810 = vsel %vm61, %v782, 0.0
    %811 = vadd.xlane.f32.xlu0 %v810
    %v812 = vpop.xlane.xlu0 %811
    %v813 = vsel %vm61, %v783, 0.0
    %814 = vadd.xlane.f32.xlu0 %v813
    %v815 = vpop.xlane.xlu0 %814
    %v816 = vsel %vm61, %v784, 0.0
    %817 = vadd.xlane.f32.xlu0 %v816
    %v818 = vpop.xlane.xlu0 %817
    %v819 = vsel %vm61, %v785, 0.0
    %820 = vadd.xlane.f32.xlu0 %v819
    %v821 = vpop.xlane.xlu0 %820
    %v822 = vsel %vm61, %v786, 0.0
    %823 = vadd.xlane.f32.xlu0 %v822
    %v824 = vpop.xlane.xlu0 %823
    %v825 = vsel %vm61, %v787, 0.0
    %826 = vadd.xlane.f32.xlu0 %v825
    %v827 = vpop.xlane.xlu0 %826
    %v828 = vsel %vm61, %v788, 0.0
    %829 = vadd.xlane.f32.xlu0 %v828
    %v830 = vpop.xlane.xlu0 %829
    %v831 = vsel %vm61, %v789, 0.0
    %832 = vadd.xlane.f32.xlu0 %v831
    %v833 = vpop.xlane.xlu0 %832
    %v834 = vsel %vm61, %v790, 0.0
    %835 = vadd.xlane.f32.xlu0 %v834
    %v836 = vpop.xlane.xlu0 %835
    %v837 = vsel %vm61, %v791, 0.0
    %838 = vadd.xlane.f32.xlu0 %v837
    %v839 = vpop.xlane.xlu0 %838
    %v840 = vmul.f32 %v794, 0.17677669
    %v841 = vmul.f32 %v797, 0.17677669
    %v842 = vmul.f32 %v800, 0.17677669
    %v843 = vmul.f32 %v803, 0.17677669
    %v844 = vmul.f32 %v806, 0.17677669
    %v845 = vmul.f32 %v809, 0.17677669
    %v846 = vmul.f32 %v812, 0.17677669
    %v847 = vmul.f32 %v815, 0.17677669
    %v848 = vmul.f32 %v818, 0.17677669
    %v849 = vmul.f32 %v821, 0.17677669
    %v850 = vmul.f32 %v824, 0.17677669
    %v851 = vmul.f32 %v827, 0.17677669
    %v852 = vmul.f32 %v830, 0.17677669
    %v853 = vmul.f32 %v833, 0.17677669
    %v854 = vmul.f32 %v836, 0.17677669
    %v855 = vmul.f32 %v839, 0.17677669
    %v856 = vmul.f32 %v840, %v23
    %v857 = vmul.f32 %v841, %v24
    %v858 = vmul.f32 %v842, %v25
    %v859 = vmul.f32 %v843, %v26
    %v860 = vmul.f32 %v844, %v27
    %v861 = vmul.f32 %v845, %v28
    %v862 = vmul.f32 %v846, %v29
    %v863 = vmul.f32 %v847, %v30
    %v864 = vmul.f32 %v848, %v31
    %v865 = vmul.f32 %v849, %v32
    %v866 = vmul.f32 %v850, %v33
    %v867 = vmul.f32 %v851, %v34
    %v868 = vmul.f32 %v852, %v35
    %v869 = vmul.f32 %v853, %v36
    %v870 = vmul.f32 %v854, %v37
    %v871 = vmul.f32 %v855, %v38
    %v872 = vsel %vm61, %v856, 0.0
    %v873 = vrot.slane %v872, 4
    %v874 = vadd.f32 %v872, %v873
    %v875 = vrot.slane %v874, 2
    %v876 = vadd.f32 %v874, %v875
    %v877 = vrot.slane %v876, 1
    %v878 = vadd.f32 %v876, %v877
    %v879 = vsel %vm61, %v857, 0.0
    %v880 = vrot.slane %v879, 4
    %v881 = vadd.f32 %v879, %v880
    %v882 = vrot.slane %v881, 2
    %v883 = vadd.f32 %v881, %v882
    %v884 = vrot.slane %v883, 1
    %v885 = vadd.f32 %v883, %v884
    %v886 = vsel %vm61, %v858, 0.0
    %v887 = vrot.slane %v886, 4
    %v888 = vadd.f32 %v886, %v887
    %v889 = vrot.slane %v888, 2
    %v890 = vadd.f32 %v888, %v889
    %v891 = vrot.slane %v890, 1
    %v892 = vadd.f32 %v890, %v891
    %v893 = vsel %vm61, %v859, 0.0
    %v894 = vrot.slane %v893, 4
    %v895 = vadd.f32 %v893, %v894
    %v896 = vrot.slane %v895, 2
    %v897 = vadd.f32 %v895, %v896
    %v898 = vrot.slane %v897, 1
    %v899 = vadd.f32 %v897, %v898
    %v900 = vsel %vm61, %v860, 0.0
    %v901 = vrot.slane %v900, 4
    %v902 = vadd.f32 %v900, %v901
    %v903 = vrot.slane %v902, 2
    %v904 = vadd.f32 %v902, %v903
    %v905 = vrot.slane %v904, 1
    %v906 = vadd.f32 %v904, %v905
    %v907 = vsel %vm61, %v861, 0.0
    %v908 = vrot.slane %v907, 4
    %v909 = vadd.f32 %v907, %v908
    %v910 = vrot.slane %v909, 2
    %v911 = vadd.f32 %v909, %v910
    %v912 = vrot.slane %v911, 1
    %v913 = vadd.f32 %v911, %v912
    %v914 = vsel %vm61, %v862, 0.0
    %v915 = vrot.slane %v914, 4
    %v916 = vadd.f32 %v914, %v915
    %v917 = vrot.slane %v916, 2
    %v918 = vadd.f32 %v916, %v917
    %v919 = vrot.slane %v918, 1
    %v920 = vadd.f32 %v918, %v919
    %v921 = vsel %vm61, %v863, 0.0
    %v922 = vrot.slane %v921, 4
    %v923 = vadd.f32 %v921, %v922
    %v924 = vrot.slane %v923, 2
    %v925 = vadd.f32 %v923, %v924
    %v926 = vrot.slane %v925, 1
    %v927 = vadd.f32 %v925, %v926
    %v928 = vsel %vm61, %v864, 0.0
    %v929 = vrot.slane %v928, 4
    %v930 = vadd.f32 %v928, %v929
    %v931 = vrot.slane %v930, 2
    %v932 = vadd.f32 %v930, %v931
    %v933 = vrot.slane %v932, 1
    %v934 = vadd.f32 %v932, %v933
    %v935 = vsel %vm61, %v865, 0.0
    %v936 = vrot.slane %v935, 4
    %v937 = vadd.f32 %v935, %v936
    %v938 = vrot.slane %v937, 2
    %v939 = vadd.f32 %v937, %v938
    %v940 = vrot.slane %v939, 1
    %v941 = vadd.f32 %v939, %v940
    %v942 = vsel %vm61, %v866, 0.0
    %v943 = vrot.slane %v942, 4
    %v944 = vadd.f32 %v942, %v943
    %v945 = vrot.slane %v944, 2
    %v946 = vadd.f32 %v944, %v945
    %v947 = vrot.slane %v946, 1
    %v948 = vadd.f32 %v946, %v947
    %v949 = vsel %vm61, %v867, 0.0
    %v950 = vrot.slane %v949, 4
    %v951 = vadd.f32 %v949, %v950
    %v952 = vrot.slane %v951, 2
    %v953 = vadd.f32 %v951, %v952
    %v954 = vrot.slane %v953, 1
    %v955 = vadd.f32 %v953, %v954
    %v956 = vsel %vm61, %v868, 0.0
    %v957 = vrot.slane %v956, 4
    %v958 = vadd.f32 %v956, %v957
    %v959 = vrot.slane %v958, 2
    %v960 = vadd.f32 %v958, %v959
    %v961 = vrot.slane %v960, 1
    %v962 = vadd.f32 %v960, %v961
    %v963 = vsel %vm61, %v869, 0.0
    %v964 = vrot.slane %v963, 4
    %v965 = vadd.f32 %v963, %v964
    %v966 = vrot.slane %v965, 2
    %v967 = vadd.f32 %v965, %v966
    %v968 = vrot.slane %v967, 1
    %v969 = vadd.f32 %v967, %v968
    %v970 = vsel %vm61, %v870, 0.0
    %v971 = vrot.slane %v970, 4
    %v972 = vadd.f32 %v970, %v971
    %v973 = vrot.slane %v972, 2
    %v974 = vadd.f32 %v972, %v973
    %v975 = vrot.slane %v974, 1
    %v976 = vadd.f32 %v974, %v975
    %v977 = vsel %vm61, %v871, 0.0
    %v978 = vrot.slane %v977, 4
    %v979 = vadd.f32 %v977, %v978
    %v980 = vrot.slane %v979, 2
    %v981 = vadd.f32 %v979, %v980
    %v982 = vrot.slane %v981, 1
    %v983 = vadd.f32 %v981, %v982
    %vm1000 = vcmask 1041409
    %v1001 = vsel %vm1000, %v885, %v878
    %vm1002 = vcmask 1042434
    %v1003 = vsel %vm1002, %v892, %v1001
    %vm1004 = vcmask 1043459
    %v1005 = vsel %vm1004, %v899, %v1003
    %vm1006 = vcmask 1044484
    %v1007 = vsel %vm1006, %v906, %v1005
    %vm1008 = vcmask 1045509
    %v1009 = vsel %vm1008, %v913, %v1007
    %vm1010 = vcmask 1046534
    %v1011 = vsel %vm1010, %v920, %v1009
    %vm1012 = vcmask 1047559
    %v1013 = vsel %vm1012, %v927, %v1011
    %v1014 = vsel %vm1000, %v941, %v934
    %v1015 = vsel %vm1002, %v948, %v1014
    %v1016 = vsel %vm1004, %v955, %v1015
    %v1017 = vsel %vm1006, %v962, %v1016
    %v1018 = vsel %vm1008, %v969, %v1017
    %v1019 = vsel %vm1010, %v976, %v1018
    %v1020 = vsel %vm1012, %v983, %v1019
    %1021 = vrot.lane.b32.xlu0 %v1013, 32
    %v1022 = vpop.permute.xlu0 %1021
    %1023 = vrot.lane.b32.xlu0 %v1020, 32
    %v1024 = vpop.permute.xlu0 %1023
    %v1027 = vsel %vm61, %v21, %v1022
    %v1028 = vsel %vm61, %v22, %v1024
    %vm1029 = vcmask 523264
    %v1031 = vsel %vm1029, %v1027, 0
    %v1034 = vsel %vm1029, %v1028, 0
    %1036 = vmatprep.subr.mxu0 0.0
    %v1037 = vand.u32 %v45, 4294901760
    %1038 = vmatpush1.msra.mxu0 %v1037
    %1039 = vmatprep.subr.mxu0 0.0
    %v1040 = vand.u32 %v46, 4294901760
    %1041 = vmatpush1.msra.mxu0 %v1040
    %1042 = vmatprep.subr.mxu0 0.0
    %v1043 = vand.u32 %v47, 4294901760
    %1044 = vmatpush1.msra.mxu0 %v1043
    %1045 = vmatprep.subr.mxu0 0.0
    %v1046 = vand.u32 %v48, 4294901760
    %1047 = vmatpush1.msra.mxu0 %v1046
    %1048 = vmatprep.subr.mxu0 0.0
    %v1049 = vand.u32 %v49, 4294901760
    %1050 = vmatpush1.msra.mxu0 %v1049
    %1051 = vmatprep.subr.mxu0 0.0
    %v1052 = vand.u32 %v50, 4294901760
    %1053 = vmatpush1.msra.mxu0 %v1052
    %1054 = vmatprep.subr.mxu0 0.0
    %v1055 = vand.u32 %v51, 4294901760
    %1056 = vmatpush1.msra.mxu0 %v1055
    %1057 = vmatprep.subr.mxu0 0.0
    %v1058 = vand.u32 %v52, 4294901760
    %1059 = vmatpush1.msra.mxu0 %v1058
    %1060 = vmatprep.subr.mxu0 0.0
    %1061 = vmatpush1.msra.mxu0 0.0
    %1062 = vmatprep.subr.mxu0 0.0
    %1063 = vmatpush1.msra.mxu0 0.0
    %1064 = vmatprep.subr.mxu0 0.0
    %1065 = vmatpush1.msra.mxu0 0.0
    %1066 = vmatprep.subr.mxu0 0.0
    %1067 = vmatpush1.msra.mxu0 0.0
    %1068 = vmatprep.subr.mxu0 0.0
    %1069 = vmatpush1.msra.mxu0 0.0
    %1070 = vmatprep.subr.mxu0 0.0
    %1071 = vmatpush1.msra.mxu0 0.0
    %1072 = vmatprep.subr.mxu0 0.0
    %1073 = vmatpush1.msra.mxu0 0.0
    %1074 = vmatprep.subr.mxu0 0.0
    %1075 = vmatpush1.msra.mxu0 0.0
    %1076 = vmatprep.subr.mxu0 0.0
    %1077 = vmatpush1.msra.mxu0 0.0
    %1078 = vmatprep.subr.mxu0 0.0
    %1079 = vmatpush1.msra.mxu0 0.0
    %1080 = vmatprep.subr.mxu0 0.0
    %1081 = vmatpush1.msra.mxu0 0.0
    %1082 = vmatprep.subr.mxu0 0.0
    %1083 = vmatpush1.msra.mxu0 0.0
    %1084 = vmatprep.subr.mxu0 0.0
    %1085 = vmatpush1.msra.mxu0 0.0
    %1086 = vmatprep.subr.mxu0 0.0
    %1087 = vmatpush1.msra.mxu0 0.0
    %1088 = vmatprep.subr.mxu0 0.0
    %1089 = vmatpush1.msra.mxu0 0.0
    %1090 = vmatprep.subr.mxu0 0.0
    %1091 = vmatpush1.msra.mxu0 0.0
    %1092 = vmatprep.subr.mxu0 0.0
    %1093 = vmatpush1.msra.mxu0 0.0
    %1094 = vmatprep.subr.mxu0 0.0
    %1095 = vmatpush1.msra.mxu0 0.0
    %1096 = vmatprep.subr.mxu0 0.0
    %1097 = vmatpush1.msra.mxu0 0.0
    %1098 = vmatprep.subr.mxu0 0.0
    %1099 = vmatpush1.msra.mxu0 0.0
    %1100 = vmatprep.subr.mxu0 0.0
    %1101 = vmatpush1.msra.mxu0 0.0
    %1102 = vmatprep.subr.mxu0 0.0
    %1103 = vmatpush1.msra.mxu0 0.0
    %1104 = vmatprep.subr.mxu0 0.0
    %1105 = vmatpush1.msra.mxu0 0.0
    %1106 = vmatprep.subr.mxu0 0.0
    %1107 = vmatpush1.msra.mxu0 0.0
    %1108 = vmatprep.mubr.f32.mxu0 0.0
    %v1109 = vand.u32 %v1031, 4294901760
    %v1110 = vsub.f32 %v1031, %v1109
    %v1111 = vand.u32 %v1110, 4294901760
    %v1112 = vsub.f32 %v1110, %v1111
    %v1113 = vand.u32 %v1112, 4294901760
    %1114 = vmatmul.mubr.f32.gmra.mrb[0].mxu0 %v1113
    %v1115 = vpop.f32.mrb[0].mxu0
    %v1116 = vadd.f32 0.0, %v1115
    %v1117 = vpop.f32.mrb[0].mxu0
    %1118 = vmatprep.mubr.f32.mxu0 0.0
    %v1119 = vand.u32 %v1034, 4294901760
    %v1120 = vsub.f32 %v1034, %v1119
    %v1121 = vand.u32 %v1120, 4294901760
    %v1122 = vsub.f32 %v1120, %v1121
    %v1123 = vand.u32 %v1122, 4294901760
    %1124 = vmatmul.mubr.f32.gmra.mrb[0].mxu0 %v1123
    %v1125 = vpop.f32.mrb[0].mxu0
    %v1126 = vadd.f32 0.0, %v1125
    %v1127 = vpop.f32.mrb[0].mxu0
    %1128 = vdwg.mxu0
    %1129 = vmatprep.subr.mxu0 0.0
    %v1130 = vand.u32 %v45, 4294901760
    %v1131 = vsub.f32 %v45, %v1130
    %v1132 = vand.u32 %v1131, 4294901760
    %v1133 = vsub.f32 %v1131, %v1132
    %v1134 = vand.u32 %v1133, 4294901760
    %1135 = vmatpush1.msra.mxu0 %v1134
    %1136 = vmatprep.subr.mxu0 0.0
    %v1137 = vand.u32 %v46, 4294901760
    %v1138 = vsub.f32 %v46, %v1137
    %v1139 = vand.u32 %v1138, 4294901760
    %v1140 = vsub.f32 %v1138, %v1139
    %v1141 = vand.u32 %v1140, 4294901760
    %1142 = vmatpush1.msra.mxu0 %v1141
    %1143 = vmatprep.subr.mxu0 0.0
    %v1144 = vand.u32 %v47, 4294901760
    %v1145 = vsub.f32 %v47, %v1144
    %v1146 = vand.u32 %v1145, 4294901760
    %v1147 = vsub.f32 %v1145, %v1146
    %v1148 = vand.u32 %v1147, 4294901760
    %1149 = vmatpush1.msra.mxu0 %v1148
    %1150 = vmatprep.subr.mxu0 0.0
    %v1151 = vand.u32 %v48, 4294901760
    %v1152 = vsub.f32 %v48, %v1151
    %v1153 = vand.u32 %v1152, 4294901760
    %v1154 = vsub.f32 %v1152, %v1153
    %v1155 = vand.u32 %v1154, 4294901760
    %1156 = vmatpush1.msra.mxu0 %v1155
    %1157 = vmatprep.subr.mxu0 0.0
    %v1158 = vand.u32 %v49, 4294901760
    %v1159 = vsub.f32 %v49, %v1158
    %v1160 = vand.u32 %v1159, 4294901760
    %v1161 = vsub.f32 %v1159, %v1160
    %v1162 = vand.u32 %v1161, 4294901760
    %1163 = vmatpush1.msra.mxu0 %v1162
    %1164 = vmatprep.subr.mxu0 0.0
    %v1165 = vand.u32 %v50, 4294901760
    %v1166 = vsub.f32 %v50, %v1165
    %v1167 = vand.u32 %v1166, 4294901760
    %v1168 = vsub.f32 %v1166, %v1167
    %v1169 = vand.u32 %v1168, 4294901760
    %1170 = vmatpush1.msra.mxu0 %v1169
    %1171 = vmatprep.subr.mxu0 0.0
    %v1172 = vand.u32 %v51, 4294901760
    %v1173 = vsub.f32 %v51, %v1172
    %v1174 = vand.u32 %v1173, 4294901760
    %v1175 = vsub.f32 %v1173, %v1174
    %v1176 = vand.u32 %v1175, 4294901760
    %1177 = vmatpush1.msra.mxu0 %v1176
    %1178 = vmatprep.subr.mxu0 0.0
    %v1179 = vand.u32 %v52, 4294901760
    %v1180 = vsub.f32 %v52, %v1179
    %v1181 = vand.u32 %v1180, 4294901760
    %v1182 = vsub.f32 %v1180, %v1181
    %v1183 = vand.u32 %v1182, 4294901760
    %1184 = vmatpush1.msra.mxu0 %v1183
    %1185 = vmatprep.subr.mxu0 0.0
    %1186 = vmatpush1.msra.mxu0 0.0
    %1187 = vmatprep.subr.mxu0 0.0
    %1188 = vmatpush1.msra.mxu0 0.0
    %1189 = vmatprep.subr.mxu0 0.0
    %1190 = vmatpush1.msra.mxu0 0.0
    %1191 = vmatprep.subr.mxu0 0.0
    %1192 = vmatpush1.msra.mxu0 0.0
    %1193 = vmatprep.subr.mxu0 0.0
    %1194 = vmatpush1.msra.mxu0 0.0
    %1195 = vmatprep.subr.mxu0 0.0
    %1196 = vmatpush1.msra.mxu0 0.0
    %1197 = vmatprep.subr.mxu0 0.0
    %1198 = vmatpush1.msra.mxu0 0.0
    %1199 = vmatprep.subr.mxu0 0.0
    %1200 = vmatpush1.msra.mxu0 0.0
    %1201 = vmatprep.subr.mxu0 0.0
    %1202 = vmatpush1.msra.mxu0 0.0
    %1203 = vmatprep.subr.mxu0 0.0
    %1204 = vmatpush1.msra.mxu0 0.0
    %1205 = vmatprep.subr.mxu0 0.0
    %1206 = vmatpush1.msra.mxu0 0.0
    %1207 = vmatprep.subr.mxu0 0.0
    %1208 = vmatpush1.msra.mxu0 0.0
    %1209 = vmatprep.subr.mxu0 0.0
    %1210 = vmatpush1.msra.mxu0 0.0
    %1211 = vmatprep.subr.mxu0 0.0
    %1212 = vmatpush1.msra.mxu0 0.0
    %1213 = vmatprep.subr.mxu0 0.0
    %1214 = vmatpush1.msra.mxu0 0.0
    %1215 = vmatprep.subr.mxu0 0.0
    %1216 = vmatpush1.msra.mxu0 0.0
    %1217 = vmatprep.subr.mxu0 0.0
    %1218 = vmatpush1.msra.mxu0 0.0
    %1219 = vmatprep.subr.mxu0 0.0
    %1220 = vmatpush1.msra.mxu0 0.0
    %1221 = vmatprep.subr.mxu0 0.0
    %1222 = vmatpush1.msra.mxu0 0.0
    %1223 = vmatprep.subr.mxu0 0.0
    %1224 = vmatpush1.msra.mxu0 0.0
    %1225 = vmatprep.subr.mxu0 0.0
    %1226 = vmatpush1.msra.mxu0 0.0
    %1227 = vmatprep.subr.mxu0 0.0
    %1228 = vmatpush1.msra.mxu0 0.0
    %1229 = vmatprep.subr.mxu0 0.0
    %1230 = vmatpush1.msra.mxu0 0.0
    %1231 = vmatprep.subr.mxu0 0.0
    %1232 = vmatpush1.msra.mxu0 0.0
    %1233 = vmatprep.mubr.f32.mxu0 0.0
    %v1234 = vand.u32 %v1031, 4294901760
    %1235 = vmatmul.mubr.f32.gmra.mrb[0].mxu0 %v1234
    %v1236 = vpop.f32.mrb[0].mxu0
    %v1237 = vadd.f32 %v1116, %v1236
    %v1238 = vpop.f32.mrb[0].mxu0
    %1239 = vmatprep.mubr.f32.mxu0 0.0
    %v1240 = vand.u32 %v1034, 4294901760
    %1241 = vmatmul.mubr.f32.gmra.mrb[0].mxu0 %v1240
    %v1242 = vpop.f32.mrb[0].mxu0
    %v1243 = vadd.f32 %v1126, %v1242
    %v1244 = vpop.f32.mrb[0].mxu0
    %1245 = vdwg.mxu0
    %1246 = vmatprep.subr.mxu0 0.0
    %v1247 = vand.u32 %v45, 4294901760
    %v1248 = vsub.f32 %v45, %v1247
    %1249 = vmatpush1.msra.mxu0 %v1248
    %1250 = vmatprep.subr.mxu0 0.0
    %v1251 = vand.u32 %v46, 4294901760
    %v1252 = vsub.f32 %v46, %v1251
    %1253 = vmatpush1.msra.mxu0 %v1252
    %1254 = vmatprep.subr.mxu0 0.0
    %v1255 = vand.u32 %v47, 4294901760
    %v1256 = vsub.f32 %v47, %v1255
    %1257 = vmatpush1.msra.mxu0 %v1256
    %1258 = vmatprep.subr.mxu0 0.0
    %v1259 = vand.u32 %v48, 4294901760
    %v1260 = vsub.f32 %v48, %v1259
    %1261 = vmatpush1.msra.mxu0 %v1260
    %1262 = vmatprep.subr.mxu0 0.0
    %v1263 = vand.u32 %v49, 4294901760
    %v1264 = vsub.f32 %v49, %v1263
    %1265 = vmatpush1.msra.mxu0 %v1264
    %1266 = vmatprep.subr.mxu0 0.0
    %v1267 = vand.u32 %v50, 4294901760
    %v1268 = vsub.f32 %v50, %v1267
    %1269 = vmatpush1.msra.mxu0 %v1268
    %1270 = vmatprep.subr.mxu0 0.0
    %v1271 = vand.u32 %v51, 4294901760
    %v1272 = vsub.f32 %v51, %v1271
    %1273 = vmatpush1.msra.mxu0 %v1272
    %1274 = vmatprep.subr.mxu0 0.0
    %v1275 = vand.u32 %v52, 4294901760
    %v1276 = vsub.f32 %v52, %v1275
    %1277 = vmatpush1.msra.mxu0 %v1276
    %1278 = vmatprep.subr.mxu0 0.0
    %1279 = vmatpush1.msra.mxu0 0.0
    %1280 = vmatprep.subr.mxu0 0.0
    %1281 = vmatpush1.msra.mxu0 0.0
    %1282 = vmatprep.subr.mxu0 0.0
    %1283 = vmatpush1.msra.mxu0 0.0
    %1284 = vmatprep.subr.mxu0 0.0
    %1285 = vmatpush1.msra.mxu0 0.0
    %1286 = vmatprep.subr.mxu0 0.0
    %1287 = vmatpush1.msra.mxu0 0.0
    %1288 = vmatprep.subr.mxu0 0.0
    %1289 = vmatpush1.msra.mxu0 0.0
    %1290 = vmatprep.subr.mxu0 0.0
    %1291 = vmatpush1.msra.mxu0 0.0
    %1292 = vmatprep.subr.mxu0 0.0
    %1293 = vmatpush1.msra.mxu0 0.0
    %1294 = vmatprep.subr.mxu0 0.0
    %1295 = vmatpush1.msra.mxu0 0.0
    %1296 = vmatprep.subr.mxu0 0.0
    %1297 = vmatpush1.msra.mxu0 0.0
    %1298 = vmatprep.subr.mxu0 0.0
    %1299 = vmatpush1.msra.mxu0 0.0
    %1300 = vmatprep.subr.mxu0 0.0
    %1301 = vmatpush1.msra.mxu0 0.0
    %1302 = vmatprep.subr.mxu0 0.0
    %1303 = vmatpush1.msra.mxu0 0.0
    %1304 = vmatprep.subr.mxu0 0.0
    %1305 = vmatpush1.msra.mxu0 0.0
    %1306 = vmatprep.subr.mxu0 0.0
    %1307 = vmatpush1.msra.mxu0 0.0
    %1308 = vmatprep.subr.mxu0 0.0
    %1309 = vmatpush1.msra.mxu0 0.0
    %1310 = vmatprep.subr.mxu0 0.0
    %1311 = vmatpush1.msra.mxu0 0.0
    %1312 = vmatprep.subr.mxu0 0.0
    %1313 = vmatpush1.msra.mxu0 0.0
    %1314 = vmatprep.subr.mxu0 0.0
    %1315 = vmatpush1.msra.mxu0 0.0
    %1316 = vmatprep.subr.mxu0 0.0
    %1317 = vmatpush1.msra.mxu0 0.0
    %1318 = vmatprep.subr.mxu0 0.0
    %1319 = vmatpush1.msra.mxu0 0.0
    %1320 = vmatprep.subr.mxu0 0.0
    %1321 = vmatpush1.msra.mxu0 0.0
    %1322 = vmatprep.subr.mxu0 0.0
    %1323 = vmatpush1.msra.mxu0 0.0
    %1324 = vmatprep.subr.mxu0 0.0
    %1325 = vmatpush1.msra.mxu0 0.0
    %1326 = vmatprep.mubr.f32.mxu0 0.0
    %v1327 = vand.u32 %v1031, 4294901760
    %v1328 = vsub.f32 %v1031, %v1327
    %1329 = vmatmul.mubr.f32.gmra.mrb[0].mxu0 %v1328
    %v1330 = vpop.f32.mrb[0].mxu0
    %v1331 = vadd.f32 %v1237, %v1330
    %v1332 = vpop.f32.mrb[0].mxu0
    %1333 = vmatprep.mubr.f32.mxu0 0.0
    %v1334 = vand.u32 %v1034, 4294901760
    %v1335 = vsub.f32 %v1034, %v1334
    %1336 = vmatmul.mubr.f32.gmra.mrb[0].mxu0 %v1335
    %v1337 = vpop.f32.mrb[0].mxu0
    %v1338 = vadd.f32 %v1243, %v1337
    %v1339 = vpop.f32.mrb[0].mxu0
    %1340 = vdwg.mxu0
    %1341 = vmatprep.subr.mxu0 0.0
    %v1342 = vand.u32 %v45, 4294901760
    %1343 = vmatpush1.msra.mxu0 %v1342
    %1344 = vmatprep.subr.mxu0 0.0
    %v1345 = vand.u32 %v46, 4294901760
    %1346 = vmatpush1.msra.mxu0 %v1345
    %1347 = vmatprep.subr.mxu0 0.0
    %v1348 = vand.u32 %v47, 4294901760
    %1349 = vmatpush1.msra.mxu0 %v1348
    %1350 = vmatprep.subr.mxu0 0.0
    %v1351 = vand.u32 %v48, 4294901760
    %1352 = vmatpush1.msra.mxu0 %v1351
    %1353 = vmatprep.subr.mxu0 0.0
    %v1354 = vand.u32 %v49, 4294901760
    %1355 = vmatpush1.msra.mxu0 %v1354
    %1356 = vmatprep.subr.mxu0 0.0
    %v1357 = vand.u32 %v50, 4294901760
    %1358 = vmatpush1.msra.mxu0 %v1357
    %1359 = vmatprep.subr.mxu0 0.0
    %v1360 = vand.u32 %v51, 4294901760
    %1361 = vmatpush1.msra.mxu0 %v1360
    %1362 = vmatprep.subr.mxu0 0.0
    %v1363 = vand.u32 %v52, 4294901760
    %1364 = vmatpush1.msra.mxu0 %v1363
    %1365 = vmatprep.subr.mxu0 0.0
    %1366 = vmatpush1.msra.mxu0 0.0
    %1367 = vmatprep.subr.mxu0 0.0
    %1368 = vmatpush1.msra.mxu0 0.0
    %1369 = vmatprep.subr.mxu0 0.0
    %1370 = vmatpush1.msra.mxu0 0.0
    %1371 = vmatprep.subr.mxu0 0.0
    %1372 = vmatpush1.msra.mxu0 0.0
    %1373 = vmatprep.subr.mxu0 0.0
    %1374 = vmatpush1.msra.mxu0 0.0
    %1375 = vmatprep.subr.mxu0 0.0
    %1376 = vmatpush1.msra.mxu0 0.0
    %1377 = vmatprep.subr.mxu0 0.0
    %1378 = vmatpush1.msra.mxu0 0.0
    %1379 = vmatprep.subr.mxu0 0.0
    %1380 = vmatpush1.msra.mxu0 0.0
    %1381 = vmatprep.subr.mxu0 0.0
    %1382 = vmatpush1.msra.mxu0 0.0
    %1383 = vmatprep.subr.mxu0 0.0
    %1384 = vmatpush1.msra.mxu0 0.0
    %1385 = vmatprep.subr.mxu0 0.0
    %1386 = vmatpush1.msra.mxu0 0.0
    %1387 = vmatprep.subr.mxu0 0.0
    %1388 = vmatpush1.msra.mxu0 0.0
    %1389 = vmatprep.subr.mxu0 0.0
    %1390 = vmatpush1.msra.mxu0 0.0
    %1391 = vmatprep.subr.mxu0 0.0
    %1392 = vmatpush1.msra.mxu0 0.0
    %1393 = vmatprep.subr.mxu0 0.0
    %1394 = vmatpush1.msra.mxu0 0.0
    %1395 = vmatprep.subr.mxu0 0.0
    %1396 = vmatpush1.msra.mxu0 0.0
    %1397 = vmatprep.subr.mxu0 0.0
    %1398 = vmatpush1.msra.mxu0 0.0
    %1399 = vmatprep.subr.mxu0 0.0
    %1400 = vmatpush1.msra.mxu0 0.0
    %1401 = vmatprep.subr.mxu0 0.0
    %1402 = vmatpush1.msra.mxu0 0.0
    %1403 = vmatprep.subr.mxu0 0.0
    %1404 = vmatpush1.msra.mxu0 0.0
    %1405 = vmatprep.subr.mxu0 0.0
    %1406 = vmatpush1.msra.mxu0 0.0
    %1407 = vmatprep.subr.mxu0 0.0
    %1408 = vmatpush1.msra.mxu0 0.0
    %1409 = vmatprep.subr.mxu0 0.0
    %1410 = vmatpush1.msra.mxu0 0.0
    %1411 = vmatprep.subr.mxu0 0.0
    %1412 = vmatpush1.msra.mxu0 0.0
    %1413 = vmatprep.mubr.f32.mxu0 0.0
    %v1414 = vand.u32 %v1031, 4294901760
    %v1415 = vsub.f32 %v1031, %v1414
    %v1416 = vand.u32 %v1415, 4294901760
    %1417 = vmatmul.mubr.f32.gmra.mrb[0].mxu0 %v1416
    %v1418 = vpop.f32.mrb[0].mxu0
    %v1419 = vadd.f32 %v1331, %v1418
    %v1420 = vpop.f32.mrb[0].mxu0
    %1421 = vmatprep.mubr.f32.mxu0 0.0
    %v1422 = vand.u32 %v1034, 4294901760
    %v1423 = vsub.f32 %v1034, %v1422
    %v1424 = vand.u32 %v1423, 4294901760
    %1425 = vmatmul.mubr.f32.gmra.mrb[0].mxu0 %v1424
    %v1426 = vpop.f32.mrb[0].mxu0
    %v1427 = vadd.f32 %v1338, %v1426
    %v1428 = vpop.f32.mrb[0].mxu0
    %1429 = vdwg.mxu0
    %1430 = vmatprep.subr.mxu0 0.0
    %v1431 = vand.u32 %v45, 4294901760
    %v1432 = vsub.f32 %v45, %v1431
    %v1433 = vand.u32 %v1432, 4294901760
    %1434 = vmatpush1.msra.mxu0 %v1433
    %1435 = vmatprep.subr.mxu0 0.0
    %v1436 = vand.u32 %v46, 4294901760
    %v1437 = vsub.f32 %v46, %v1436
    %v1438 = vand.u32 %v1437, 4294901760
    %1439 = vmatpush1.msra.mxu0 %v1438
    %1440 = vmatprep.subr.mxu0 0.0
    %v1441 = vand.u32 %v47, 4294901760
    %v1442 = vsub.f32 %v47, %v1441
    %v1443 = vand.u32 %v1442, 4294901760
    %1444 = vmatpush1.msra.mxu0 %v1443
    %1445 = vmatprep.subr.mxu0 0.0
    %v1446 = vand.u32 %v48, 4294901760
    %v1447 = vsub.f32 %v48, %v1446
    %v1448 = vand.u32 %v1447, 4294901760
    %1449 = vmatpush1.msra.mxu0 %v1448
    %1450 = vmatprep.subr.mxu0 0.0
    %v1451 = vand.u32 %v49, 4294901760
    %v1452 = vsub.f32 %v49, %v1451
    %v1453 = vand.u32 %v1452, 4294901760
    %1454 = vmatpush1.msra.mxu0 %v1453
    %1455 = vmatprep.subr.mxu0 0.0
    %v1456 = vand.u32 %v50, 4294901760
    %v1457 = vsub.f32 %v50, %v1456
    %v1458 = vand.u32 %v1457, 4294901760
    %1459 = vmatpush1.msra.mxu0 %v1458
    %1460 = vmatprep.subr.mxu0 0.0
    %v1461 = vand.u32 %v51, 4294901760
    %v1462 = vsub.f32 %v51, %v1461
    %v1463 = vand.u32 %v1462, 4294901760
    %1464 = vmatpush1.msra.mxu0 %v1463
    %1465 = vmatprep.subr.mxu0 0.0
    %v1466 = vand.u32 %v52, 4294901760
    %v1467 = vsub.f32 %v52, %v1466
    %v1468 = vand.u32 %v1467, 4294901760
    %1469 = vmatpush1.msra.mxu0 %v1468
    %1470 = vmatprep.subr.mxu0 0.0
    %1471 = vmatpush1.msra.mxu0 0.0
    %1472 = vmatprep.subr.mxu0 0.0
    %1473 = vmatpush1.msra.mxu0 0.0
    %1474 = vmatprep.subr.mxu0 0.0
    %1475 = vmatpush1.msra.mxu0 0.0
    %1476 = vmatprep.subr.mxu0 0.0
    %1477 = vmatpush1.msra.mxu0 0.0
    %1478 = vmatprep.subr.mxu0 0.0
    %1479 = vmatpush1.msra.mxu0 0.0
    %1480 = vmatprep.subr.mxu0 0.0
    %1481 = vmatpush1.msra.mxu0 0.0
    %1482 = vmatprep.subr.mxu0 0.0
    %1483 = vmatpush1.msra.mxu0 0.0
    %1484 = vmatprep.subr.mxu0 0.0
    %1485 = vmatpush1.msra.mxu0 0.0
    %1486 = vmatprep.subr.mxu0 0.0
    %1487 = vmatpush1.msra.mxu0 0.0
    %1488 = vmatprep.subr.mxu0 0.0
    %1489 = vmatpush1.msra.mxu0 0.0
    %1490 = vmatprep.subr.mxu0 0.0
    %1491 = vmatpush1.msra.mxu0 0.0
    %1492 = vmatprep.subr.mxu0 0.0
    %1493 = vmatpush1.msra.mxu0 0.0
    %1494 = vmatprep.subr.mxu0 0.0
    %1495 = vmatpush1.msra.mxu0 0.0
    %1496 = vmatprep.subr.mxu0 0.0
    %1497 = vmatpush1.msra.mxu0 0.0
    %1498 = vmatprep.subr.mxu0 0.0
    %1499 = vmatpush1.msra.mxu0 0.0
    %1500 = vmatprep.subr.mxu0 0.0
    %1501 = vmatpush1.msra.mxu0 0.0
    %1502 = vmatprep.subr.mxu0 0.0
    %1503 = vmatpush1.msra.mxu0 0.0
    %1504 = vmatprep.subr.mxu0 0.0
    %1505 = vmatpush1.msra.mxu0 0.0
    %1506 = vmatprep.subr.mxu0 0.0
    %1507 = vmatpush1.msra.mxu0 0.0
    %1508 = vmatprep.subr.mxu0 0.0
    %1509 = vmatpush1.msra.mxu0 0.0
    %1510 = vmatprep.subr.mxu0 0.0
    %1511 = vmatpush1.msra.mxu0 0.0
    %1512 = vmatprep.subr.mxu0 0.0
    %1513 = vmatpush1.msra.mxu0 0.0
    %1514 = vmatprep.subr.mxu0 0.0
    %1515 = vmatpush1.msra.mxu0 0.0
    %1516 = vmatprep.subr.mxu0 0.0
    %1517 = vmatpush1.msra.mxu0 0.0
    %1518 = vmatprep.mubr.f32.mxu0 0.0
    %v1519 = vand.u32 %v1031, 4294901760
    %1520 = vmatmul.mubr.f32.gmra.mrb[0].mxu0 %v1519
    %v1521 = vpop.f32.mrb[0].mxu0
    %v1522 = vadd.f32 %v1419, %v1521
    %v1523 = vpop.f32.mrb[0].mxu0
    %1524 = vmatprep.mubr.f32.mxu0 0.0
    %v1525 = vand.u32 %v1034, 4294901760
    %1526 = vmatmul.mubr.f32.gmra.mrb[0].mxu0 %v1525
    %v1527 = vpop.f32.mrb[0].mxu0
    %v1528 = vadd.f32 %v1427, %v1527
    %v1529 = vpop.f32.mrb[0].mxu0
    %1530 = vdwg.mxu0
    %1531 = vmatprep.subr.mxu0 0.0
    %v1532 = vand.u32 %v45, 4294901760
    %1533 = vmatpush1.msra.mxu0 %v1532
    %1534 = vmatprep.subr.mxu0 0.0
    %v1535 = vand.u32 %v46, 4294901760
    %1536 = vmatpush1.msra.mxu0 %v1535
    %1537 = vmatprep.subr.mxu0 0.0
    %v1538 = vand.u32 %v47, 4294901760
    %1539 = vmatpush1.msra.mxu0 %v1538
    %1540 = vmatprep.subr.mxu0 0.0
    %v1541 = vand.u32 %v48, 4294901760
    %1542 = vmatpush1.msra.mxu0 %v1541
    %1543 = vmatprep.subr.mxu0 0.0
    %v1544 = vand.u32 %v49, 4294901760
    %1545 = vmatpush1.msra.mxu0 %v1544
    %1546 = vmatprep.subr.mxu0 0.0
    %v1547 = vand.u32 %v50, 4294901760
    %1548 = vmatpush1.msra.mxu0 %v1547
    %1549 = vmatprep.subr.mxu0 0.0
    %v1550 = vand.u32 %v51, 4294901760
    %1551 = vmatpush1.msra.mxu0 %v1550
    %1552 = vmatprep.subr.mxu0 0.0
    %v1553 = vand.u32 %v52, 4294901760
    %1554 = vmatpush1.msra.mxu0 %v1553
    %1555 = vmatprep.subr.mxu0 0.0
    %1556 = vmatpush1.msra.mxu0 0.0
    %1557 = vmatprep.subr.mxu0 0.0
    %1558 = vmatpush1.msra.mxu0 0.0
    %1559 = vmatprep.subr.mxu0 0.0
    %1560 = vmatpush1.msra.mxu0 0.0
    %1561 = vmatprep.subr.mxu0 0.0
    %1562 = vmatpush1.msra.mxu0 0.0
    %1563 = vmatprep.subr.mxu0 0.0
    %1564 = vmatpush1.msra.mxu0 0.0
    %1565 = vmatprep.subr.mxu0 0.0
    %1566 = vmatpush1.msra.mxu0 0.0
    %1567 = vmatprep.subr.mxu0 0.0
    %1568 = vmatpush1.msra.mxu0 0.0
    %1569 = vmatprep.subr.mxu0 0.0
    %1570 = vmatpush1.msra.mxu0 0.0
    %1571 = vmatprep.subr.mxu0 0.0
    %1572 = vmatpush1.msra.mxu0 0.0
    %1573 = vmatprep.subr.mxu0 0.0
    %1574 = vmatpush1.msra.mxu0 0.0
    %1575 = vmatprep.subr.mxu0 0.0
    %1576 = vmatpush1.msra.mxu0 0.0
    %1577 = vmatprep.subr.mxu0 0.0
    %1578 = vmatpush1.msra.mxu0 0.0
    %1579 = vmatprep.subr.mxu0 0.0
    %1580 = vmatpush1.msra.mxu0 0.0
    %1581 = vmatprep.subr.mxu0 0.0
    %1582 = vmatpush1.msra.mxu0 0.0
    %1583 = vmatprep.subr.mxu0 0.0
    %1584 = vmatpush1.msra.mxu0 0.0
    %1585 = vmatprep.subr.mxu0 0.0
    %1586 = vmatpush1.msra.mxu0 0.0
    %1587 = vmatprep.subr.mxu0 0.0
    %1588 = vmatpush1.msra.mxu0 0.0
    %1589 = vmatprep.subr.mxu0 0.0
    %1590 = vmatpush1.msra.mxu0 0.0
    %1591 = vmatprep.subr.mxu0 0.0
    %1592 = vmatpush1.msra.mxu0 0.0
    %1593 = vmatprep.subr.mxu0 0.0
    %1594 = vmatpush1.msra.mxu0 0.0
    %1595 = vmatprep.subr.mxu0 0.0
    %1596 = vmatpush1.msra.mxu0 0.0
    %1597 = vmatprep.subr.mxu0 0.0
    %1598 = vmatpush1.msra.mxu0 0.0
    %1599 = vmatprep.subr.mxu0 0.0
    %1600 = vmatpush1.msra.mxu0 0.0
    %1601 = vmatprep.subr.mxu0 0.0
    %1602 = vmatpush1.msra.mxu0 0.0
    %1603 = vmatprep.mubr.f32.mxu0 0.0
    %v1604 = vand.u32 %v1031, 4294901760
    %1605 = vmatmul.mubr.f32.gmra.mrb[0].mxu0 %v1604
    %v1606 = vpop.f32.mrb[0].mxu0
    %v1607 = vadd.f32 %v1522, %v1606
    %v1608 = vpop.f32.mrb[0].mxu0
    %1609 = vmatprep.mubr.f32.mxu0 0.0
    %v1610 = vand.u32 %v1034, 4294901760
    %1611 = vmatmul.mubr.f32.gmra.mrb[0].mxu0 %v1610
    %v1612 = vpop.f32.mrb[0].mxu0
    %v1613 = vadd.f32 %v1528, %v1612
    %v1614 = vpop.f32.mrb[0].mxu0
    %1615 = vdwg.mxu0
    %v1616 = vsub.f32 0.0, %v1607
    %v1617 = vsub.f32 0.0, %v1613
    %v1618 = vmul.f32 %v1616, 1.442695
    %v1619 = vpow.pop %v1618
    %v1620 = vmul.f32 %v1617, 1.442695
    %v1621 = vpow.pop %v1620
    %v1622 = vadd.f32 %v1619, 1.0
    %v1623 = vadd.f32 %v1621, 1.0
    %v1624 = vrcp.pop %v1622
    %v1625 = vrcp.pop %v1623
    %v1626 = vrot.slane %v21, 1
    %v1627 = vrot.slane %v21, 2
    %v1628 = vrot.slane %v21, 3
    %v1629 = vrot.slane %v21, 4
    %v1630 = vrot.slane %v21, 5
    %v1631 = vrot.slane %v21, 6
    %v1632 = vrot.slane %v21, 7
    %v1633 = vrot.slane %v22, 1
    %v1634 = vrot.slane %v22, 2
    %v1635 = vrot.slane %v22, 3
    %v1636 = vrot.slane %v22, 4
    %v1637 = vrot.slane %v22, 5
    %v1638 = vrot.slane %v22, 6
    %v1639 = vrot.slane %v22, 7
    %v1656 = vsub.f32 %v878, %v21
    %v1657 = vsub.f32 %v885, %v1626
    %v1658 = vsub.f32 %v892, %v1627
    %v1659 = vsub.f32 %v899, %v1628
    %v1660 = vsub.f32 %v906, %v1629
    %v1661 = vsub.f32 %v913, %v1630
    %v1662 = vsub.f32 %v920, %v1631
    %v1663 = vsub.f32 %v927, %v1632
    %v1664 = vsub.f32 %v934, %v22
    %v1665 = vsub.f32 %v941, %v1633
    %v1666 = vsub.f32 %v948, %v1634
    %v1667 = vsub.f32 %v955, %v1635
    %v1668 = vsub.f32 %v962, %v1636
    %v1669 = vsub.f32 %v969, %v1637
    %v1670 = vsub.f32 %v976, %v1638
    %v1671 = vsub.f32 %v983, %v1639
    %v1688 = vrot.slane %v1657, 7
    %v1689 = vsel %vm1000, %v1688, %v1656
    %v1690 = vrot.slane %v1658, 6
    %v1691 = vsel %vm1002, %v1690, %v1689
    %v1692 = vrot.slane %v1659, 5
    %v1693 = vsel %vm1004, %v1692, %v1691
    %v1694 = vrot.slane %v1660, 4
    %v1695 = vsel %vm1006, %v1694, %v1693
    %v1696 = vrot.slane %v1661, 3
    %v1697 = vsel %vm1008, %v1696, %v1695
    %v1698 = vrot.slane %v1662, 2
    %v1699 = vsel %vm1010, %v1698, %v1697
    %v1700 = vrot.slane %v1663, 1
    %v1701 = vsel %vm1012, %v1700, %v1699
    %v1702 = vrot.slane %v1665, 7
    %v1703 = vsel %vm1000, %v1702, %v1664
    %v1704 = vrot.slane %v1666, 6
    %v1705 = vsel %vm1002, %v1704, %v1703
    %v1706 = vrot.slane %v1667, 5
    %v1707 = vsel %vm1004, %v1706, %v1705
    %v1708 = vrot.slane %v1668, 4
    %v1709 = vsel %vm1006, %v1708, %v1707
    %v1710 = vrot.slane %v1669, 3
    %v1711 = vsel %vm1008, %v1710, %v1709
    %v1712 = vrot.slane %v1670, 2
    %v1713 = vsel %vm1010, %v1712, %v1711
    %v1714 = vrot.slane %v1671, 1
    %v1715 = vsel %vm1012, %v1714, %v1713
    %v1718 = vmul.f32 %v1624, %v1701
    %v1719 = vmul.f32 %v1625, %v1715
    %v1720 = vadd.f32 %v21, %v1718
    %v1721 = vadd.f32 %v22, %v1719
    %v1722 = vsel %vm61, %v1720, 0.0
    %v1723 = vrot.slane %v1722, 4
    %v1724 = vadd.f32 %v1722, %v1723
    %v1725 = vrot.slane %v1724, 2
    %v1726 = vadd.f32 %v1724, %v1725
    %v1727 = vrot.slane %v1726, 1
    %v1728 = vadd.f32 %v1726, %v1727
    %v1729 = vsel %vm61, %v1721, 0.0
    %v1730 = vrot.slane %v1729, 4
    %v1731 = vadd.f32 %v1729, %v1730
    %v1732 = vrot.slane %v1731, 2
    %v1733 = vadd.f32 %v1731, %v1732
    %v1734 = vrot.slane %v1733, 1
    %v1735 = vadd.f32 %v1733, %v1734
    %v1736 = vmul.f32 %v1728, 0.125
    %v1737 = vmul.f32 %v1735, 0.125
    %v1739 = vsel %vm61, %v1720, 0
    %v1742 = vsel %vm61, %v1721, 0
    %1744 = vmatprep.subr.mxu0 0.0
    %v1745 = vand.u32 %v53, 4294901760
    %1746 = vmatpush1.msra.mxu0 %v1745
    %1747 = vmatprep.subr.mxu0 0.0
    %v1748 = vand.u32 %v54, 4294901760
    %1749 = vmatpush1.msra.mxu0 %v1748
    %1750 = vmatprep.subr.mxu0 0.0
    %v1751 = vand.u32 %v55, 4294901760
    %1752 = vmatpush1.msra.mxu0 %v1751
    %1753 = vmatprep.subr.mxu0 0.0
    %v1754 = vand.u32 %v56, 4294901760
    %1755 = vmatpush1.msra.mxu0 %v1754
    %1756 = vmatprep.subr.mxu0 0.0
    %1757 = vmatpush1.msra.mxu0 0.0
    %1758 = vmatprep.subr.mxu0 0.0
    %1759 = vmatpush1.msra.mxu0 0.0
    %1760 = vmatprep.subr.mxu0 0.0
    %1761 = vmatpush1.msra.mxu0 0.0
    %1762 = vmatprep.subr.mxu0 0.0
    %1763 = vmatpush1.msra.mxu0 0.0
    %1764 = vmatprep.subr.mxu0 0.0
    %1765 = vmatpush1.msra.mxu0 0.0
    %1766 = vmatprep.subr.mxu0 0.0
    %1767 = vmatpush1.msra.mxu0 0.0
    %1768 = vmatprep.subr.mxu0 0.0
    %1769 = vmatpush1.msra.mxu0 0.0
    %1770 = vmatprep.subr.mxu0 0.0
    %1771 = vmatpush1.msra.mxu0 0.0
    %1772 = vmatprep.subr.mxu0 0.0
    %1773 = vmatpush1.msra.mxu0 0.0
    %1774 = vmatprep.subr.mxu0 0.0
    %1775 = vmatpush1.msra.mxu0 0.0
    %1776 = vmatprep.subr.mxu0 0.0
    %1777 = vmatpush1.msra.mxu0 0.0
    %1778 = vmatprep.subr.mxu0 0.0
    %1779 = vmatpush1.msra.mxu0 0.0
    %1780 = vmatprep.subr.mxu0 0.0
    %1781 = vmatpush1.msra.mxu0 0.0
    %1782 = vmatprep.subr.mxu0 0.0
    %1783 = vmatpush1.msra.mxu0 0.0
    %1784 = vmatprep.subr.mxu0 0.0
    %1785 = vmatpush1.msra.mxu0 0.0
    %1786 = vmatprep.subr.mxu0 0.0
    %1787 = vmatpush1.msra.mxu0 0.0
    %1788 = vmatprep.subr.mxu0 0.0
    %1789 = vmatpush1.msra.mxu0 0.0
    %1790 = vmatprep.subr.mxu0 0.0
    %1791 = vmatpush1.msra.mxu0 0.0
    %1792 = vmatprep.subr.mxu0 0.0
    %1793 = vmatpush1.msra.mxu0 0.0
    %1794 = vmatprep.subr.mxu0 0.0
    %1795 = vmatpush1.msra.mxu0 0.0
    %1796 = vmatprep.subr.mxu0 0.0
    %1797 = vmatpush1.msra.mxu0 0.0
    %1798 = vmatprep.subr.mxu0 0.0
    %1799 = vmatpush1.msra.mxu0 0.0
    %1800 = vmatprep.subr.mxu0 0.0
    %1801 = vmatpush1.msra.mxu0 0.0
    %1802 = vmatprep.subr.mxu0 0.0
    %1803 = vmatpush1.msra.mxu0 0.0
    %1804 = vmatprep.subr.mxu0 0.0
    %1805 = vmatpush1.msra.mxu0 0.0
    %1806 = vmatprep.subr.mxu0 0.0
    %1807 = vmatpush1.msra.mxu0 0.0
    %1808 = vmatprep.subr.mxu0 0.0
    %1809 = vmatpush1.msra.mxu0 0.0
    %1810 = vmatprep.subr.mxu0 0.0
    %1811 = vmatpush1.msra.mxu0 0.0
    %1812 = vmatprep.mubr.f32.mxu0 0.0
    %v1813 = vand.u32 %v1739, 4294901760
    %v1814 = vsub.f32 %v1739, %v1813
    %v1815 = vand.u32 %v1814, 4294901760
    %v1816 = vsub.f32 %v1814, %v1815
    %v1817 = vand.u32 %v1816, 4294901760
    %1818 = vmatmul.mubr.f32.gmra.mrb[0].mxu0 %v1817
    %v1819 = vpop.f32.mrb[0].mxu0
    %v1820 = vadd.f32 0.0, %v1819
    %v1821 = vpop.f32.mrb[0].mxu0
    %1822 = vmatprep.mubr.f32.mxu0 0.0
    %v1823 = vand.u32 %v1742, 4294901760
    %v1824 = vsub.f32 %v1742, %v1823
    %v1825 = vand.u32 %v1824, 4294901760
    %v1826 = vsub.f32 %v1824, %v1825
    %v1827 = vand.u32 %v1826, 4294901760
    %1828 = vmatmul.mubr.f32.gmra.mrb[0].mxu0 %v1827
    %v1829 = vpop.f32.mrb[0].mxu0
    %v1830 = vadd.f32 0.0, %v1829
    %v1831 = vpop.f32.mrb[0].mxu0
    %1832 = vdwg.mxu0
    %1833 = vmatprep.subr.mxu0 0.0
    %v1834 = vand.u32 %v53, 4294901760
    %v1835 = vsub.f32 %v53, %v1834
    %v1836 = vand.u32 %v1835, 4294901760
    %v1837 = vsub.f32 %v1835, %v1836
    %v1838 = vand.u32 %v1837, 4294901760
    %1839 = vmatpush1.msra.mxu0 %v1838
    %1840 = vmatprep.subr.mxu0 0.0
    %v1841 = vand.u32 %v54, 4294901760
    %v1842 = vsub.f32 %v54, %v1841
    %v1843 = vand.u32 %v1842, 4294901760
    %v1844 = vsub.f32 %v1842, %v1843
    %v1845 = vand.u32 %v1844, 4294901760
    %1846 = vmatpush1.msra.mxu0 %v1845
    %1847 = vmatprep.subr.mxu0 0.0
    %v1848 = vand.u32 %v55, 4294901760
    %v1849 = vsub.f32 %v55, %v1848
    %v1850 = vand.u32 %v1849, 4294901760
    %v1851 = vsub.f32 %v1849, %v1850
    %v1852 = vand.u32 %v1851, 4294901760
    %1853 = vmatpush1.msra.mxu0 %v1852
    %1854 = vmatprep.subr.mxu0 0.0
    %v1855 = vand.u32 %v56, 4294901760
    %v1856 = vsub.f32 %v56, %v1855
    %v1857 = vand.u32 %v1856, 4294901760
    %v1858 = vsub.f32 %v1856, %v1857
    %v1859 = vand.u32 %v1858, 4294901760
    %1860 = vmatpush1.msra.mxu0 %v1859
    %1861 = vmatprep.subr.mxu0 0.0
    %1862 = vmatpush1.msra.mxu0 0.0
    %1863 = vmatprep.subr.mxu0 0.0
    %1864 = vmatpush1.msra.mxu0 0.0
    %1865 = vmatprep.subr.mxu0 0.0
    %1866 = vmatpush1.msra.mxu0 0.0
    %1867 = vmatprep.subr.mxu0 0.0
    %1868 = vmatpush1.msra.mxu0 0.0
    %1869 = vmatprep.subr.mxu0 0.0
    %1870 = vmatpush1.msra.mxu0 0.0
    %1871 = vmatprep.subr.mxu0 0.0
    %1872 = vmatpush1.msra.mxu0 0.0
    %1873 = vmatprep.subr.mxu0 0.0
    %1874 = vmatpush1.msra.mxu0 0.0
    %1875 = vmatprep.subr.mxu0 0.0
    %1876 = vmatpush1.msra.mxu0 0.0
    %1877 = vmatprep.subr.mxu0 0.0
    %1878 = vmatpush1.msra.mxu0 0.0
    %1879 = vmatprep.subr.mxu0 0.0
    %1880 = vmatpush1.msra.mxu0 0.0
    %1881 = vmatprep.subr.mxu0 0.0
    %1882 = vmatpush1.msra.mxu0 0.0
    %1883 = vmatprep.subr.mxu0 0.0
    %1884 = vmatpush1.msra.mxu0 0.0
    %1885 = vmatprep.subr.mxu0 0.0
    %1886 = vmatpush1.msra.mxu0 0.0
    %1887 = vmatprep.subr.mxu0 0.0
    %1888 = vmatpush1.msra.mxu0 0.0
    %1889 = vmatprep.subr.mxu0 0.0
    %1890 = vmatpush1.msra.mxu0 0.0
    %1891 = vmatprep.subr.mxu0 0.0
    %1892 = vmatpush1.msra.mxu0 0.0
    %1893 = vmatprep.subr.mxu0 0.0
    %1894 = vmatpush1.msra.mxu0 0.0
    %1895 = vmatprep.subr.mxu0 0.0
    %1896 = vmatpush1.msra.mxu0 0.0
    %1897 = vmatprep.subr.mxu0 0.0
    %1898 = vmatpush1.msra.mxu0 0.0
    %1899 = vmatprep.subr.mxu0 0.0
    %1900 = vmatpush1.msra.mxu0 0.0
    %1901 = vmatprep.subr.mxu0 0.0
    %1902 = vmatpush1.msra.mxu0 0.0
    %1903 = vmatprep.subr.mxu0 0.0
    %1904 = vmatpush1.msra.mxu0 0.0
    %1905 = vmatprep.subr.mxu0 0.0
    %1906 = vmatpush1.msra.mxu0 0.0
    %1907 = vmatprep.subr.mxu0 0.0
    %1908 = vmatpush1.msra.mxu0 0.0
    %1909 = vmatprep.subr.mxu0 0.0
    %1910 = vmatpush1.msra.mxu0 0.0
    %1911 = vmatprep.subr.mxu0 0.0
    %1912 = vmatpush1.msra.mxu0 0.0
    %1913 = vmatprep.subr.mxu0 0.0
    %1914 = vmatpush1.msra.mxu0 0.0
    %1915 = vmatprep.subr.mxu0 0.0
    %1916 = vmatpush1.msra.mxu0 0.0
    %1917 = vmatprep.mubr.f32.mxu0 0.0
    %v1918 = vand.u32 %v1739, 4294901760
    %1919 = vmatmul.mubr.f32.gmra.mrb[0].mxu0 %v1918
    %v1920 = vpop.f32.mrb[0].mxu0
    %v1921 = vadd.f32 %v1820, %v1920
    %v1922 = vpop.f32.mrb[0].mxu0
    %1923 = vmatprep.mubr.f32.mxu0 0.0
    %v1924 = vand.u32 %v1742, 4294901760
    %1925 = vmatmul.mubr.f32.gmra.mrb[0].mxu0 %v1924
    %v1926 = vpop.f32.mrb[0].mxu0
    %v1927 = vadd.f32 %v1830, %v1926
    %v1928 = vpop.f32.mrb[0].mxu0
    %1929 = vdwg.mxu0
    %1930 = vmatprep.subr.mxu0 0.0
    %v1931 = vand.u32 %v53, 4294901760
    %v1932 = vsub.f32 %v53, %v1931
    %1933 = vmatpush1.msra.mxu0 %v1932
    %1934 = vmatprep.subr.mxu0 0.0
    %v1935 = vand.u32 %v54, 4294901760
    %v1936 = vsub.f32 %v54, %v1935
    %1937 = vmatpush1.msra.mxu0 %v1936
    %1938 = vmatprep.subr.mxu0 0.0
    %v1939 = vand.u32 %v55, 4294901760
    %v1940 = vsub.f32 %v55, %v1939
    %1941 = vmatpush1.msra.mxu0 %v1940
    %1942 = vmatprep.subr.mxu0 0.0
    %v1943 = vand.u32 %v56, 4294901760
    %v1944 = vsub.f32 %v56, %v1943
    %1945 = vmatpush1.msra.mxu0 %v1944
    %1946 = vmatprep.subr.mxu0 0.0
    %1947 = vmatpush1.msra.mxu0 0.0
    %1948 = vmatprep.subr.mxu0 0.0
    %1949 = vmatpush1.msra.mxu0 0.0
    %1950 = vmatprep.subr.mxu0 0.0
    %1951 = vmatpush1.msra.mxu0 0.0
    %1952 = vmatprep.subr.mxu0 0.0
    %1953 = vmatpush1.msra.mxu0 0.0
    %1954 = vmatprep.subr.mxu0 0.0
    %1955 = vmatpush1.msra.mxu0 0.0
    %1956 = vmatprep.subr.mxu0 0.0
    %1957 = vmatpush1.msra.mxu0 0.0
    %1958 = vmatprep.subr.mxu0 0.0
    %1959 = vmatpush1.msra.mxu0 0.0
    %1960 = vmatprep.subr.mxu0 0.0
    %1961 = vmatpush1.msra.mxu0 0.0
    %1962 = vmatprep.subr.mxu0 0.0
    %1963 = vmatpush1.msra.mxu0 0.0
    %1964 = vmatprep.subr.mxu0 0.0
    %1965 = vmatpush1.msra.mxu0 0.0
    %1966 = vmatprep.subr.mxu0 0.0
    %1967 = vmatpush1.msra.mxu0 0.0
    %1968 = vmatprep.subr.mxu0 0.0
    %1969 = vmatpush1.msra.mxu0 0.0
    %1970 = vmatprep.subr.mxu0 0.0
    %1971 = vmatpush1.msra.mxu0 0.0
    %1972 = vmatprep.subr.mxu0 0.0
    %1973 = vmatpush1.msra.mxu0 0.0
    %1974 = vmatprep.subr.mxu0 0.0
    %1975 = vmatpush1.msra.mxu0 0.0
    %1976 = vmatprep.subr.mxu0 0.0
    %1977 = vmatpush1.msra.mxu0 0.0
    %1978 = vmatprep.subr.mxu0 0.0
    %1979 = vmatpush1.msra.mxu0 0.0
    %1980 = vmatprep.subr.mxu0 0.0
    %1981 = vmatpush1.msra.mxu0 0.0
    %1982 = vmatprep.subr.mxu0 0.0
    %1983 = vmatpush1.msra.mxu0 0.0
    %1984 = vmatprep.subr.mxu0 0.0
    %1985 = vmatpush1.msra.mxu0 0.0
    %1986 = vmatprep.subr.mxu0 0.0
    %1987 = vmatpush1.msra.mxu0 0.0
    %1988 = vmatprep.subr.mxu0 0.0
    %1989 = vmatpush1.msra.mxu0 0.0
    %1990 = vmatprep.subr.mxu0 0.0
    %1991 = vmatpush1.msra.mxu0 0.0
    %1992 = vmatprep.subr.mxu0 0.0
    %1993 = vmatpush1.msra.mxu0 0.0
    %1994 = vmatprep.subr.mxu0 0.0
    %1995 = vmatpush1.msra.mxu0 0.0
    %1996 = vmatprep.subr.mxu0 0.0
    %1997 = vmatpush1.msra.mxu0 0.0
    %1998 = vmatprep.subr.mxu0 0.0
    %1999 = vmatpush1.msra.mxu0 0.0
    %2000 = vmatprep.subr.mxu0 0.0
    %2001 = vmatpush1.msra.mxu0 0.0
    %2002 = vmatprep.mubr.f32.mxu0 0.0
    %v2003 = vand.u32 %v1739, 4294901760
    %v2004 = vsub.f32 %v1739, %v2003
    %2005 = vmatmul.mubr.f32.gmra.mrb[0].mxu0 %v2004
    %v2006 = vpop.f32.mrb[0].mxu0
    %v2007 = vadd.f32 %v1921, %v2006
    %v2008 = vpop.f32.mrb[0].mxu0
    %2009 = vmatprep.mubr.f32.mxu0 0.0
    %v2010 = vand.u32 %v1742, 4294901760
    %v2011 = vsub.f32 %v1742, %v2010
    %2012 = vmatmul.mubr.f32.gmra.mrb[0].mxu0 %v2011
    %v2013 = vpop.f32.mrb[0].mxu0
    %v2014 = vadd.f32 %v1927, %v2013
    %v2015 = vpop.f32.mrb[0].mxu0
    %2016 = vdwg.mxu0
    %2017 = vmatprep.subr.mxu0 0.0
    %v2018 = vand.u32 %v53, 4294901760
    %2019 = vmatpush1.msra.mxu0 %v2018
    %2020 = vmatprep.subr.mxu0 0.0
    %v2021 = vand.u32 %v54, 4294901760
    %2022 = vmatpush1.msra.mxu0 %v2021
    %2023 = vmatprep.subr.mxu0 0.0
    %v2024 = vand.u32 %v55, 4294901760
    %2025 = vmatpush1.msra.mxu0 %v2024
    %2026 = vmatprep.subr.mxu0 0.0
    %v2027 = vand.u32 %v56, 4294901760
    %2028 = vmatpush1.msra.mxu0 %v2027
    %2029 = vmatprep.subr.mxu0 0.0
    %2030 = vmatpush1.msra.mxu0 0.0
    %2031 = vmatprep.subr.mxu0 0.0
    %2032 = vmatpush1.msra.mxu0 0.0
    %2033 = vmatprep.subr.mxu0 0.0
    %2034 = vmatpush1.msra.mxu0 0.0
    %2035 = vmatprep.subr.mxu0 0.0
    %2036 = vmatpush1.msra.mxu0 0.0
    %2037 = vmatprep.subr.mxu0 0.0
    %2038 = vmatpush1.msra.mxu0 0.0
    %2039 = vmatprep.subr.mxu0 0.0
    %2040 = vmatpush1.msra.mxu0 0.0
    %2041 = vmatprep.subr.mxu0 0.0
    %2042 = vmatpush1.msra.mxu0 0.0
    %2043 = vmatprep.subr.mxu0 0.0
    %2044 = vmatpush1.msra.mxu0 0.0
    %2045 = vmatprep.subr.mxu0 0.0
    %2046 = vmatpush1.msra.mxu0 0.0
    %2047 = vmatprep.subr.mxu0 0.0
    %2048 = vmatpush1.msra.mxu0 0.0
    %2049 = vmatprep.subr.mxu0 0.0
    %2050 = vmatpush1.msra.mxu0 0.0
    %2051 = vmatprep.subr.mxu0 0.0
    %2052 = vmatpush1.msra.mxu0 0.0
    %2053 = vmatprep.subr.mxu0 0.0
    %2054 = vmatpush1.msra.mxu0 0.0
    %2055 = vmatprep.subr.mxu0 0.0
    %2056 = vmatpush1.msra.mxu0 0.0
    %2057 = vmatprep.subr.mxu0 0.0
    %2058 = vmatpush1.msra.mxu0 0.0
    %2059 = vmatprep.subr.mxu0 0.0
    %2060 = vmatpush1.msra.mxu0 0.0
    %2061 = vmatprep.subr.mxu0 0.0
    %2062 = vmatpush1.msra.mxu0 0.0
    %2063 = vmatprep.subr.mxu0 0.0
    %2064 = vmatpush1.msra.mxu0 0.0
    %2065 = vmatprep.subr.mxu0 0.0
    %2066 = vmatpush1.msra.mxu0 0.0
    %2067 = vmatprep.subr.mxu0 0.0
    %2068 = vmatpush1.msra.mxu0 0.0
    %2069 = vmatprep.subr.mxu0 0.0
    %2070 = vmatpush1.msra.mxu0 0.0
    %2071 = vmatprep.subr.mxu0 0.0
    %2072 = vmatpush1.msra.mxu0 0.0
    %2073 = vmatprep.subr.mxu0 0.0
    %2074 = vmatpush1.msra.mxu0 0.0
    %2075 = vmatprep.subr.mxu0 0.0
    %2076 = vmatpush1.msra.mxu0 0.0
    %2077 = vmatprep.subr.mxu0 0.0
    %2078 = vmatpush1.msra.mxu0 0.0
    %2079 = vmatprep.subr.mxu0 0.0
    %2080 = vmatpush1.msra.mxu0 0.0
    %2081 = vmatprep.subr.mxu0 0.0
    %2082 = vmatpush1.msra.mxu0 0.0
    %2083 = vmatprep.subr.mxu0 0.0
    %2084 = vmatpush1.msra.mxu0 0.0
    %2085 = vmatprep.mubr.f32.mxu0 0.0
    %v2086 = vand.u32 %v1739, 4294901760
    %v2087 = vsub.f32 %v1739, %v2086
    %v2088 = vand.u32 %v2087, 4294901760
    %2089 = vmatmul.mubr.f32.gmra.mrb[0].mxu0 %v2088
    %v2090 = vpop.f32.mrb[0].mxu0
    %v2091 = vadd.f32 %v2007, %v2090
    %v2092 = vpop.f32.mrb[0].mxu0
    %2093 = vmatprep.mubr.f32.mxu0 0.0
    %v2094 = vand.u32 %v1742, 4294901760
    %v2095 = vsub.f32 %v1742, %v2094
    %v2096 = vand.u32 %v2095, 4294901760
    %2097 = vmatmul.mubr.f32.gmra.mrb[0].mxu0 %v2096
    %v2098 = vpop.f32.mrb[0].mxu0
    %v2099 = vadd.f32 %v2014, %v2098
    %v2100 = vpop.f32.mrb[0].mxu0
    %2101 = vdwg.mxu0
    %2102 = vmatprep.subr.mxu0 0.0
    %v2103 = vand.u32 %v53, 4294901760
    %v2104 = vsub.f32 %v53, %v2103
    %v2105 = vand.u32 %v2104, 4294901760
    %2106 = vmatpush1.msra.mxu0 %v2105
    %2107 = vmatprep.subr.mxu0 0.0
    %v2108 = vand.u32 %v54, 4294901760
    %v2109 = vsub.f32 %v54, %v2108
    %v2110 = vand.u32 %v2109, 4294901760
    %2111 = vmatpush1.msra.mxu0 %v2110
    %2112 = vmatprep.subr.mxu0 0.0
    %v2113 = vand.u32 %v55, 4294901760
    %v2114 = vsub.f32 %v55, %v2113
    %v2115 = vand.u32 %v2114, 4294901760
    %2116 = vmatpush1.msra.mxu0 %v2115
    %2117 = vmatprep.subr.mxu0 0.0
    %v2118 = vand.u32 %v56, 4294901760
    %v2119 = vsub.f32 %v56, %v2118
    %v2120 = vand.u32 %v2119, 4294901760
    %2121 = vmatpush1.msra.mxu0 %v2120
    %2122 = vmatprep.subr.mxu0 0.0
    %2123 = vmatpush1.msra.mxu0 0.0
    %2124 = vmatprep.subr.mxu0 0.0
    %2125 = vmatpush1.msra.mxu0 0.0
    %2126 = vmatprep.subr.mxu0 0.0
    %2127 = vmatpush1.msra.mxu0 0.0
    %2128 = vmatprep.subr.mxu0 0.0
    %2129 = vmatpush1.msra.mxu0 0.0
    %2130 = vmatprep.subr.mxu0 0.0
    %2131 = vmatpush1.msra.mxu0 0.0
    %2132 = vmatprep.subr.mxu0 0.0
    %2133 = vmatpush1.msra.mxu0 0.0
    %2134 = vmatprep.subr.mxu0 0.0
    %2135 = vmatpush1.msra.mxu0 0.0
    %2136 = vmatprep.subr.mxu0 0.0
    %2137 = vmatpush1.msra.mxu0 0.0
    %2138 = vmatprep.subr.mxu0 0.0
    %2139 = vmatpush1.msra.mxu0 0.0
    %2140 = vmatprep.subr.mxu0 0.0
    %2141 = vmatpush1.msra.mxu0 0.0
    %2142 = vmatprep.subr.mxu0 0.0
    %2143 = vmatpush1.msra.mxu0 0.0
    %2144 = vmatprep.subr.mxu0 0.0
    %2145 = vmatpush1.msra.mxu0 0.0
    %2146 = vmatprep.subr.mxu0 0.0
    %2147 = vmatpush1.msra.mxu0 0.0
    %2148 = vmatprep.subr.mxu0 0.0
    %2149 = vmatpush1.msra.mxu0 0.0
    %2150 = vmatprep.subr.mxu0 0.0
    %2151 = vmatpush1.msra.mxu0 0.0
    %2152 = vmatprep.subr.mxu0 0.0
    %2153 = vmatpush1.msra.mxu0 0.0
    %2154 = vmatprep.subr.mxu0 0.0
    %2155 = vmatpush1.msra.mxu0 0.0
    %2156 = vmatprep.subr.mxu0 0.0
    %2157 = vmatpush1.msra.mxu0 0.0
    %2158 = vmatprep.subr.mxu0 0.0
    %2159 = vmatpush1.msra.mxu0 0.0
    %2160 = vmatprep.subr.mxu0 0.0
    %2161 = vmatpush1.msra.mxu0 0.0
    %2162 = vmatprep.subr.mxu0 0.0
    %2163 = vmatpush1.msra.mxu0 0.0
    %2164 = vmatprep.subr.mxu0 0.0
    %2165 = vmatpush1.msra.mxu0 0.0
    %2166 = vmatprep.subr.mxu0 0.0
    %2167 = vmatpush1.msra.mxu0 0.0
    %2168 = vmatprep.subr.mxu0 0.0
    %2169 = vmatpush1.msra.mxu0 0.0
    %2170 = vmatprep.subr.mxu0 0.0
    %2171 = vmatpush1.msra.mxu0 0.0
    %2172 = vmatprep.subr.mxu0 0.0
    %2173 = vmatpush1.msra.mxu0 0.0
    %2174 = vmatprep.subr.mxu0 0.0
    %2175 = vmatpush1.msra.mxu0 0.0
    %2176 = vmatprep.subr.mxu0 0.0
    %2177 = vmatpush1.msra.mxu0 0.0
    %2178 = vmatprep.mubr.f32.mxu0 0.0
    %v2179 = vand.u32 %v1739, 4294901760
    %2180 = vmatmul.mubr.f32.gmra.mrb[0].mxu0 %v2179
    %v2181 = vpop.f32.mrb[0].mxu0
    %v2182 = vadd.f32 %v2091, %v2181
    %v2183 = vpop.f32.mrb[0].mxu0
    %2184 = vmatprep.mubr.f32.mxu0 0.0
    %v2185 = vand.u32 %v1742, 4294901760
    %2186 = vmatmul.mubr.f32.gmra.mrb[0].mxu0 %v2185
    %v2187 = vpop.f32.mrb[0].mxu0
    %v2188 = vadd.f32 %v2099, %v2187
    %v2189 = vpop.f32.mrb[0].mxu0
    %2190 = vdwg.mxu0
    %2191 = vmatprep.subr.mxu0 0.0
    %v2192 = vand.u32 %v53, 4294901760
    %2193 = vmatpush1.msra.mxu0 %v2192
    %2194 = vmatprep.subr.mxu0 0.0
    %v2195 = vand.u32 %v54, 4294901760
    %2196 = vmatpush1.msra.mxu0 %v2195
    %2197 = vmatprep.subr.mxu0 0.0
    %v2198 = vand.u32 %v55, 4294901760
    %2199 = vmatpush1.msra.mxu0 %v2198
    %2200 = vmatprep.subr.mxu0 0.0
    %v2201 = vand.u32 %v56, 4294901760
    %2202 = vmatpush1.msra.mxu0 %v2201
    %2203 = vmatprep.subr.mxu0 0.0
    %2204 = vmatpush1.msra.mxu0 0.0
    %2205 = vmatprep.subr.mxu0 0.0
    %2206 = vmatpush1.msra.mxu0 0.0
    %2207 = vmatprep.subr.mxu0 0.0
    %2208 = vmatpush1.msra.mxu0 0.0
    %2209 = vmatprep.subr.mxu0 0.0
    %2210 = vmatpush1.msra.mxu0 0.0
    %2211 = vmatprep.subr.mxu0 0.0
    %2212 = vmatpush1.msra.mxu0 0.0
    %2213 = vmatprep.subr.mxu0 0.0
    %2214 = vmatpush1.msra.mxu0 0.0
    %2215 = vmatprep.subr.mxu0 0.0
    %2216 = vmatpush1.msra.mxu0 0.0
    %2217 = vmatprep.subr.mxu0 0.0
    %2218 = vmatpush1.msra.mxu0 0.0
    %2219 = vmatprep.subr.mxu0 0.0
    %2220 = vmatpush1.msra.mxu0 0.0
    %2221 = vmatprep.subr.mxu0 0.0
    %2222 = vmatpush1.msra.mxu0 0.0
    %2223 = vmatprep.subr.mxu0 0.0
    %2224 = vmatpush1.msra.mxu0 0.0
    %2225 = vmatprep.subr.mxu0 0.0
    %2226 = vmatpush1.msra.mxu0 0.0
    %2227 = vmatprep.subr.mxu0 0.0
    %2228 = vmatpush1.msra.mxu0 0.0
    %2229 = vmatprep.subr.mxu0 0.0
    %2230 = vmatpush1.msra.mxu0 0.0
    %2231 = vmatprep.subr.mxu0 0.0
    %2232 = vmatpush1.msra.mxu0 0.0
    %2233 = vmatprep.subr.mxu0 0.0
    %2234 = vmatpush1.msra.mxu0 0.0
    %2235 = vmatprep.subr.mxu0 0.0
    %2236 = vmatpush1.msra.mxu0 0.0
    %2237 = vmatprep.subr.mxu0 0.0
    %2238 = vmatpush1.msra.mxu0 0.0
    %2239 = vmatprep.subr.mxu0 0.0
    %2240 = vmatpush1.msra.mxu0 0.0
    %2241 = vmatprep.subr.mxu0 0.0
    %2242 = vmatpush1.msra.mxu0 0.0
    %2243 = vmatprep.subr.mxu0 0.0
    %2244 = vmatpush1.msra.mxu0 0.0
    %2245 = vmatprep.subr.mxu0 0.0
    %2246 = vmatpush1.msra.mxu0 0.0
    %2247 = vmatprep.subr.mxu0 0.0
    %2248 = vmatpush1.msra.mxu0 0.0
    %2249 = vmatprep.subr.mxu0 0.0
    %2250 = vmatpush1.msra.mxu0 0.0
    %2251 = vmatprep.subr.mxu0 0.0
    %2252 = vmatpush1.msra.mxu0 0.0
    %2253 = vmatprep.subr.mxu0 0.0
    %2254 = vmatpush1.msra.mxu0 0.0
    %2255 = vmatprep.subr.mxu0 0.0
    %2256 = vmatpush1.msra.mxu0 0.0
    %2257 = vmatprep.subr.mxu0 0.0
    %2258 = vmatpush1.msra.mxu0 0.0
    %2259 = vmatprep.mubr.f32.mxu0 0.0
    %v2260 = vand.u32 %v1739, 4294901760
    %2261 = vmatmul.mubr.f32.gmra.mrb[0].mxu0 %v2260
    %v2262 = vpop.f32.mrb[0].mxu0
    %v2263 = vadd.f32 %v2182, %v2262
    %v2264 = vpop.f32.mrb[0].mxu0
    %2265 = vmatprep.mubr.f32.mxu0 0.0
    %v2266 = vand.u32 %v1742, 4294901760
    %2267 = vmatmul.mubr.f32.gmra.mrb[0].mxu0 %v2266
    %v2268 = vpop.f32.mrb[0].mxu0
    %v2269 = vadd.f32 %v2188, %v2268
    %v2270 = vpop.f32.mrb[0].mxu0
    %2271 = vdwg.mxu0
    %v2274 = vsel %vm1000, %v1737, %v1736
    %v2275 = vsel %vm61, %v2274, 0
    %2277 = vmatprep.subr.mxu0 0.0
    %v2278 = vand.u32 %v57, 4294901760
    %2279 = vmatpush1.msra.mxu0 %v2278
    %2280 = vmatprep.subr.mxu0 0.0
    %v2281 = vand.u32 %v58, 4294901760
    %2282 = vmatpush1.msra.mxu0 %v2281
    %2283 = vmatprep.subr.mxu0 0.0
    %v2284 = vand.u32 %v59, 4294901760
    %2285 = vmatpush1.msra.mxu0 %v2284
    %2286 = vmatprep.subr.mxu0 0.0
    %v2287 = vand.u32 %v60, 4294901760
    %2288 = vmatpush1.msra.mxu0 %v2287
    %2289 = vmatprep.subr.mxu0 0.0
    %2290 = vmatpush1.msra.mxu0 0.0
    %2291 = vmatprep.subr.mxu0 0.0
    %2292 = vmatpush1.msra.mxu0 0.0
    %2293 = vmatprep.subr.mxu0 0.0
    %2294 = vmatpush1.msra.mxu0 0.0
    %2295 = vmatprep.subr.mxu0 0.0
    %2296 = vmatpush1.msra.mxu0 0.0
    %2297 = vmatprep.subr.mxu0 0.0
    %2298 = vmatpush1.msra.mxu0 0.0
    %2299 = vmatprep.subr.mxu0 0.0
    %2300 = vmatpush1.msra.mxu0 0.0
    %2301 = vmatprep.subr.mxu0 0.0
    %2302 = vmatpush1.msra.mxu0 0.0
    %2303 = vmatprep.subr.mxu0 0.0
    %2304 = vmatpush1.msra.mxu0 0.0
    %2305 = vmatprep.subr.mxu0 0.0
    %2306 = vmatpush1.msra.mxu0 0.0
    %2307 = vmatprep.subr.mxu0 0.0
    %2308 = vmatpush1.msra.mxu0 0.0
    %2309 = vmatprep.subr.mxu0 0.0
    %2310 = vmatpush1.msra.mxu0 0.0
    %2311 = vmatprep.subr.mxu0 0.0
    %2312 = vmatpush1.msra.mxu0 0.0
    %2313 = vmatprep.subr.mxu0 0.0
    %2314 = vmatpush1.msra.mxu0 0.0
    %2315 = vmatprep.subr.mxu0 0.0
    %2316 = vmatpush1.msra.mxu0 0.0
    %2317 = vmatprep.subr.mxu0 0.0
    %2318 = vmatpush1.msra.mxu0 0.0
    %2319 = vmatprep.subr.mxu0 0.0
    %2320 = vmatpush1.msra.mxu0 0.0
    %2321 = vmatprep.subr.mxu0 0.0
    %2322 = vmatpush1.msra.mxu0 0.0
    %2323 = vmatprep.subr.mxu0 0.0
    %2324 = vmatpush1.msra.mxu0 0.0
    %2325 = vmatprep.subr.mxu0 0.0
    %2326 = vmatpush1.msra.mxu0 0.0
    %2327 = vmatprep.subr.mxu0 0.0
    %2328 = vmatpush1.msra.mxu0 0.0
    %2329 = vmatprep.subr.mxu0 0.0
    %2330 = vmatpush1.msra.mxu0 0.0
    %2331 = vmatprep.subr.mxu0 0.0
    %2332 = vmatpush1.msra.mxu0 0.0
    %2333 = vmatprep.subr.mxu0 0.0
    %2334 = vmatpush1.msra.mxu0 0.0
    %2335 = vmatprep.subr.mxu0 0.0
    %2336 = vmatpush1.msra.mxu0 0.0
    %2337 = vmatprep.subr.mxu0 0.0
    %2338 = vmatpush1.msra.mxu0 0.0
    %2339 = vmatprep.subr.mxu0 0.0
    %2340 = vmatpush1.msra.mxu0 0.0
    %2341 = vmatprep.subr.mxu0 0.0
    %2342 = vmatpush1.msra.mxu0 0.0
    %2343 = vmatprep.subr.mxu0 0.0
    %2344 = vmatpush1.msra.mxu0 0.0
    %2345 = vmatprep.mubr.f32.mxu0 0.0
    %v2346 = vand.u32 %v2275, 4294901760
    %v2347 = vsub.f32 %v2275, %v2346
    %v2348 = vand.u32 %v2347, 4294901760
    %v2349 = vsub.f32 %v2347, %v2348
    %v2350 = vand.u32 %v2349, 4294901760
    %2351 = vmatmul.mubr.f32.gmra.mrb[0].mxu0 %v2350
    %v2352 = vpop.f32.mrb[0].mxu0
    %v2353 = vadd.f32 0.0, %v2352
    %v2354 = vpop.f32.mrb[0].mxu0
    %2355 = vdwg.mxu0
    %2356 = vmatprep.subr.mxu0 0.0
    %v2357 = vand.u32 %v57, 4294901760
    %v2358 = vsub.f32 %v57, %v2357
    %v2359 = vand.u32 %v2358, 4294901760
    %v2360 = vsub.f32 %v2358, %v2359
    %v2361 = vand.u32 %v2360, 4294901760
    %2362 = vmatpush1.msra.mxu0 %v2361
    %2363 = vmatprep.subr.mxu0 0.0
    %v2364 = vand.u32 %v58, 4294901760
    %v2365 = vsub.f32 %v58, %v2364
    %v2366 = vand.u32 %v2365, 4294901760
    %v2367 = vsub.f32 %v2365, %v2366
    %v2368 = vand.u32 %v2367, 4294901760
    %2369 = vmatpush1.msra.mxu0 %v2368
    %2370 = vmatprep.subr.mxu0 0.0
    %v2371 = vand.u32 %v59, 4294901760
    %v2372 = vsub.f32 %v59, %v2371
    %v2373 = vand.u32 %v2372, 4294901760
    %v2374 = vsub.f32 %v2372, %v2373
    %v2375 = vand.u32 %v2374, 4294901760
    %2376 = vmatpush1.msra.mxu0 %v2375
    %2377 = vmatprep.subr.mxu0 0.0
    %v2378 = vand.u32 %v60, 4294901760
    %v2379 = vsub.f32 %v60, %v2378
    %v2380 = vand.u32 %v2379, 4294901760
    %v2381 = vsub.f32 %v2379, %v2380
    %v2382 = vand.u32 %v2381, 4294901760
    %2383 = vmatpush1.msra.mxu0 %v2382
    %2384 = vmatprep.subr.mxu0 0.0
    %2385 = vmatpush1.msra.mxu0 0.0
    %2386 = vmatprep.subr.mxu0 0.0
    %2387 = vmatpush1.msra.mxu0 0.0
    %2388 = vmatprep.subr.mxu0 0.0
    %2389 = vmatpush1.msra.mxu0 0.0
    %2390 = vmatprep.subr.mxu0 0.0
    %2391 = vmatpush1.msra.mxu0 0.0
    %2392 = vmatprep.subr.mxu0 0.0
    %2393 = vmatpush1.msra.mxu0 0.0
    %2394 = vmatprep.subr.mxu0 0.0
    %2395 = vmatpush1.msra.mxu0 0.0
    %2396 = vmatprep.subr.mxu0 0.0
    %2397 = vmatpush1.msra.mxu0 0.0
    %2398 = vmatprep.subr.mxu0 0.0
    %2399 = vmatpush1.msra.mxu0 0.0
    %2400 = vmatprep.subr.mxu0 0.0
    %2401 = vmatpush1.msra.mxu0 0.0
    %2402 = vmatprep.subr.mxu0 0.0
    %2403 = vmatpush1.msra.mxu0 0.0
    %2404 = vmatprep.subr.mxu0 0.0
    %2405 = vmatpush1.msra.mxu0 0.0
    %2406 = vmatprep.subr.mxu0 0.0
    %2407 = vmatpush1.msra.mxu0 0.0
    %2408 = vmatprep.subr.mxu0 0.0
    %2409 = vmatpush1.msra.mxu0 0.0
    %2410 = vmatprep.subr.mxu0 0.0
    %2411 = vmatpush1.msra.mxu0 0.0
    %2412 = vmatprep.subr.mxu0 0.0
    %2413 = vmatpush1.msra.mxu0 0.0
    %2414 = vmatprep.subr.mxu0 0.0
    %2415 = vmatpush1.msra.mxu0 0.0
    %2416 = vmatprep.subr.mxu0 0.0
    %2417 = vmatpush1.msra.mxu0 0.0
    %2418 = vmatprep.subr.mxu0 0.0
    %2419 = vmatpush1.msra.mxu0 0.0
    %2420 = vmatprep.subr.mxu0 0.0
    %2421 = vmatpush1.msra.mxu0 0.0
    %2422 = vmatprep.subr.mxu0 0.0
    %2423 = vmatpush1.msra.mxu0 0.0
    %2424 = vmatprep.subr.mxu0 0.0
    %2425 = vmatpush1.msra.mxu0 0.0
    %2426 = vmatprep.subr.mxu0 0.0
    %2427 = vmatpush1.msra.mxu0 0.0
    %2428 = vmatprep.subr.mxu0 0.0
    %2429 = vmatpush1.msra.mxu0 0.0
    %2430 = vmatprep.subr.mxu0 0.0
    %2431 = vmatpush1.msra.mxu0 0.0
    %2432 = vmatprep.subr.mxu0 0.0
    %2433 = vmatpush1.msra.mxu0 0.0
    %2434 = vmatprep.subr.mxu0 0.0
    %2435 = vmatpush1.msra.mxu0 0.0
    %2436 = vmatprep.subr.mxu0 0.0
    %2437 = vmatpush1.msra.mxu0 0.0
    %2438 = vmatprep.subr.mxu0 0.0
    %2439 = vmatpush1.msra.mxu0 0.0
    %2440 = vmatprep.mubr.f32.mxu0 0.0
    %v2441 = vand.u32 %v2275, 4294901760
    %2442 = vmatmul.mubr.f32.gmra.mrb[0].mxu0 %v2441
    %v2443 = vpop.f32.mrb[0].mxu0
    %v2444 = vadd.f32 %v2353, %v2443
    %v2445 = vpop.f32.mrb[0].mxu0
    %2446 = vdwg.mxu0
    %2447 = vmatprep.subr.mxu0 0.0
    %v2448 = vand.u32 %v57, 4294901760
    %v2449 = vsub.f32 %v57, %v2448
    %2450 = vmatpush1.msra.mxu0 %v2449
    %2451 = vmatprep.subr.mxu0 0.0
    %v2452 = vand.u32 %v58, 4294901760
    %v2453 = vsub.f32 %v58, %v2452
    %2454 = vmatpush1.msra.mxu0 %v2453
    %2455 = vmatprep.subr.mxu0 0.0
    %v2456 = vand.u32 %v59, 4294901760
    %v2457 = vsub.f32 %v59, %v2456
    %2458 = vmatpush1.msra.mxu0 %v2457
    %2459 = vmatprep.subr.mxu0 0.0
    %v2460 = vand.u32 %v60, 4294901760
    %v2461 = vsub.f32 %v60, %v2460
    %2462 = vmatpush1.msra.mxu0 %v2461
    %2463 = vmatprep.subr.mxu0 0.0
    %2464 = vmatpush1.msra.mxu0 0.0
    %2465 = vmatprep.subr.mxu0 0.0
    %2466 = vmatpush1.msra.mxu0 0.0
    %2467 = vmatprep.subr.mxu0 0.0
    %2468 = vmatpush1.msra.mxu0 0.0
    %2469 = vmatprep.subr.mxu0 0.0
    %2470 = vmatpush1.msra.mxu0 0.0
    %2471 = vmatprep.subr.mxu0 0.0
    %2472 = vmatpush1.msra.mxu0 0.0
    %2473 = vmatprep.subr.mxu0 0.0
    %2474 = vmatpush1.msra.mxu0 0.0
    %2475 = vmatprep.subr.mxu0 0.0
    %2476 = vmatpush1.msra.mxu0 0.0
    %2477 = vmatprep.subr.mxu0 0.0
    %2478 = vmatpush1.msra.mxu0 0.0
    %2479 = vmatprep.subr.mxu0 0.0
    %2480 = vmatpush1.msra.mxu0 0.0
    %2481 = vmatprep.subr.mxu0 0.0
    %2482 = vmatpush1.msra.mxu0 0.0
    %2483 = vmatprep.subr.mxu0 0.0
    %2484 = vmatpush1.msra.mxu0 0.0
    %2485 = vmatprep.subr.mxu0 0.0
    %2486 = vmatpush1.msra.mxu0 0.0
    %2487 = vmatprep.subr.mxu0 0.0
    %2488 = vmatpush1.msra.mxu0 0.0
    %2489 = vmatprep.subr.mxu0 0.0
    %2490 = vmatpush1.msra.mxu0 0.0
    %2491 = vmatprep.subr.mxu0 0.0
    %2492 = vmatpush1.msra.mxu0 0.0
    %2493 = vmatprep.subr.mxu0 0.0
    %2494 = vmatpush1.msra.mxu0 0.0
    %2495 = vmatprep.subr.mxu0 0.0
    %2496 = vmatpush1.msra.mxu0 0.0
    %2497 = vmatprep.subr.mxu0 0.0
    %2498 = vmatpush1.msra.mxu0 0.0
    %2499 = vmatprep.subr.mxu0 0.0
    %2500 = vmatpush1.msra.mxu0 0.0
    %2501 = vmatprep.subr.mxu0 0.0
    %2502 = vmatpush1.msra.mxu0 0.0
    %2503 = vmatprep.subr.mxu0 0.0
    %2504 = vmatpush1.msra.mxu0 0.0
    %2505 = vmatprep.subr.mxu0 0.0
    %2506 = vmatpush1.msra.mxu0 0.0
    %2507 = vmatprep.subr.mxu0 0.0
    %2508 = vmatpush1.msra.mxu0 0.0
    %2509 = vmatprep.subr.mxu0 0.0
    %2510 = vmatpush1.msra.mxu0 0.0
    %2511 = vmatprep.subr.mxu0 0.0
    %2512 = vmatpush1.msra.mxu0 0.0
    %2513 = vmatprep.subr.mxu0 0.0
    %2514 = vmatpush1.msra.mxu0 0.0
    %2515 = vmatprep.subr.mxu0 0.0
    %2516 = vmatpush1.msra.mxu0 0.0
    %2517 = vmatprep.subr.mxu0 0.0
    %2518 = vmatpush1.msra.mxu0 0.0
    %2519 = vmatprep.mubr.f32.mxu0 0.0
    %v2520 = vand.u32 %v2275, 4294901760
    %v2521 = vsub.f32 %v2275, %v2520
    %2522 = vmatmul.mubr.f32.gmra.mrb[0].mxu0 %v2521
    %v2523 = vpop.f32.mrb[0].mxu0
    %v2524 = vadd.f32 %v2444, %v2523
    %v2525 = vpop.f32.mrb[0].mxu0
    %2526 = vdwg.mxu0
    %2527 = vmatprep.subr.mxu0 0.0
    %v2528 = vand.u32 %v57, 4294901760
    %2529 = vmatpush1.msra.mxu0 %v2528
    %2530 = vmatprep.subr.mxu0 0.0
    %v2531 = vand.u32 %v58, 4294901760
    %2532 = vmatpush1.msra.mxu0 %v2531
    %2533 = vmatprep.subr.mxu0 0.0
    %v2534 = vand.u32 %v59, 4294901760
    %2535 = vmatpush1.msra.mxu0 %v2534
    %2536 = vmatprep.subr.mxu0 0.0
    %v2537 = vand.u32 %v60, 4294901760
    %2538 = vmatpush1.msra.mxu0 %v2537
    %2539 = vmatprep.subr.mxu0 0.0
    %2540 = vmatpush1.msra.mxu0 0.0
    %2541 = vmatprep.subr.mxu0 0.0
    %2542 = vmatpush1.msra.mxu0 0.0
    %2543 = vmatprep.subr.mxu0 0.0
    %2544 = vmatpush1.msra.mxu0 0.0
    %2545 = vmatprep.subr.mxu0 0.0
    %2546 = vmatpush1.msra.mxu0 0.0
    %2547 = vmatprep.subr.mxu0 0.0
    %2548 = vmatpush1.msra.mxu0 0.0
    %2549 = vmatprep.subr.mxu0 0.0
    %2550 = vmatpush1.msra.mxu0 0.0
    %2551 = vmatprep.subr.mxu0 0.0
    %2552 = vmatpush1.msra.mxu0 0.0
    %2553 = vmatprep.subr.mxu0 0.0
    %2554 = vmatpush1.msra.mxu0 0.0
    %2555 = vmatprep.subr.mxu0 0.0
    %2556 = vmatpush1.msra.mxu0 0.0
    %2557 = vmatprep.subr.mxu0 0.0
    %2558 = vmatpush1.msra.mxu0 0.0
    %2559 = vmatprep.subr.mxu0 0.0
    %2560 = vmatpush1.msra.mxu0 0.0
    %2561 = vmatprep.subr.mxu0 0.0
    %2562 = vmatpush1.msra.mxu0 0.0
    %2563 = vmatprep.subr.mxu0 0.0
    %2564 = vmatpush1.msra.mxu0 0.0
    %2565 = vmatprep.subr.mxu0 0.0
    %2566 = vmatpush1.msra.mxu0 0.0
    %2567 = vmatprep.subr.mxu0 0.0
    %2568 = vmatpush1.msra.mxu0 0.0
    %2569 = vmatprep.subr.mxu0 0.0
    %2570 = vmatpush1.msra.mxu0 0.0
    %2571 = vmatprep.subr.mxu0 0.0
    %2572 = vmatpush1.msra.mxu0 0.0
    %2573 = vmatprep.subr.mxu0 0.0
    %2574 = vmatpush1.msra.mxu0 0.0
    %2575 = vmatprep.subr.mxu0 0.0
    %2576 = vmatpush1.msra.mxu0 0.0
    %2577 = vmatprep.subr.mxu0 0.0
    %2578 = vmatpush1.msra.mxu0 0.0
    %2579 = vmatprep.subr.mxu0 0.0
    %2580 = vmatpush1.msra.mxu0 0.0
    %2581 = vmatprep.subr.mxu0 0.0
    %2582 = vmatpush1.msra.mxu0 0.0
    %2583 = vmatprep.subr.mxu0 0.0
    %2584 = vmatpush1.msra.mxu0 0.0
    %2585 = vmatprep.subr.mxu0 0.0
    %2586 = vmatpush1.msra.mxu0 0.0
    %2587 = vmatprep.subr.mxu0 0.0
    %2588 = vmatpush1.msra.mxu0 0.0
    %2589 = vmatprep.subr.mxu0 0.0
    %2590 = vmatpush1.msra.mxu0 0.0
    %2591 = vmatprep.subr.mxu0 0.0
    %2592 = vmatpush1.msra.mxu0 0.0
    %2593 = vmatprep.subr.mxu0 0.0
    %2594 = vmatpush1.msra.mxu0 0.0
    %2595 = vmatprep.mubr.f32.mxu0 0.0
    %v2596 = vand.u32 %v2275, 4294901760
    %v2597 = vsub.f32 %v2275, %v2596
    %v2598 = vand.u32 %v2597, 4294901760
    %2599 = vmatmul.mubr.f32.gmra.mrb[0].mxu0 %v2598
    %v2600 = vpop.f32.mrb[0].mxu0
    %v2601 = vadd.f32 %v2524, %v2600
    %v2602 = vpop.f32.mrb[0].mxu0
    %2603 = vdwg.mxu0
    %2604 = vmatprep.subr.mxu0 0.0
    %v2605 = vand.u32 %v57, 4294901760
    %v2606 = vsub.f32 %v57, %v2605
    %v2607 = vand.u32 %v2606, 4294901760
    %2608 = vmatpush1.msra.mxu0 %v2607
    %2609 = vmatprep.subr.mxu0 0.0
    %v2610 = vand.u32 %v58, 4294901760
    %v2611 = vsub.f32 %v58, %v2610
    %v2612 = vand.u32 %v2611, 4294901760
    %2613 = vmatpush1.msra.mxu0 %v2612
    %2614 = vmatprep.subr.mxu0 0.0
    %v2615 = vand.u32 %v59, 4294901760
    %v2616 = vsub.f32 %v59, %v2615
    %v2617 = vand.u32 %v2616, 4294901760
    %2618 = vmatpush1.msra.mxu0 %v2617
    %2619 = vmatprep.subr.mxu0 0.0
    %v2620 = vand.u32 %v60, 4294901760
    %v2621 = vsub.f32 %v60, %v2620
    %v2622 = vand.u32 %v2621, 4294901760
    %2623 = vmatpush1.msra.mxu0 %v2622
    %2624 = vmatprep.subr.mxu0 0.0
    %2625 = vmatpush1.msra.mxu0 0.0
    %2626 = vmatprep.subr.mxu0 0.0
    %2627 = vmatpush1.msra.mxu0 0.0
    %2628 = vmatprep.subr.mxu0 0.0
    %2629 = vmatpush1.msra.mxu0 0.0
    %2630 = vmatprep.subr.mxu0 0.0
    %2631 = vmatpush1.msra.mxu0 0.0
    %2632 = vmatprep.subr.mxu0 0.0
    %2633 = vmatpush1.msra.mxu0 0.0
    %2634 = vmatprep.subr.mxu0 0.0
    %2635 = vmatpush1.msra.mxu0 0.0
    %2636 = vmatprep.subr.mxu0 0.0
    %2637 = vmatpush1.msra.mxu0 0.0
    %2638 = vmatprep.subr.mxu0 0.0
    %2639 = vmatpush1.msra.mxu0 0.0
    %2640 = vmatprep.subr.mxu0 0.0
    %2641 = vmatpush1.msra.mxu0 0.0
    %2642 = vmatprep.subr.mxu0 0.0
    %2643 = vmatpush1.msra.mxu0 0.0
    %2644 = vmatprep.subr.mxu0 0.0
    %2645 = vmatpush1.msra.mxu0 0.0
    %2646 = vmatprep.subr.mxu0 0.0
    %2647 = vmatpush1.msra.mxu0 0.0
    %2648 = vmatprep.subr.mxu0 0.0
    %2649 = vmatpush1.msra.mxu0 0.0
    %2650 = vmatprep.subr.mxu0 0.0
    %2651 = vmatpush1.msra.mxu0 0.0
    %2652 = vmatprep.subr.mxu0 0.0
    %2653 = vmatpush1.msra.mxu0 0.0
    %2654 = vmatprep.subr.mxu0 0.0
    %2655 = vmatpush1.msra.mxu0 0.0
    %2656 = vmatprep.subr.mxu0 0.0
    %2657 = vmatpush1.msra.mxu0 0.0
    %2658 = vmatprep.subr.mxu0 0.0
    %2659 = vmatpush1.msra.mxu0 0.0
    %2660 = vmatprep.subr.mxu0 0.0
    %2661 = vmatpush1.msra.mxu0 0.0
    %2662 = vmatprep.subr.mxu0 0.0
    %2663 = vmatpush1.msra.mxu0 0.0
    %2664 = vmatprep.subr.mxu0 0.0
    %2665 = vmatpush1.msra.mxu0 0.0
    %2666 = vmatprep.subr.mxu0 0.0
    %2667 = vmatpush1.msra.mxu0 0.0
    %2668 = vmatprep.subr.mxu0 0.0
    %2669 = vmatpush1.msra.mxu0 0.0
    %2670 = vmatprep.subr.mxu0 0.0
    %2671 = vmatpush1.msra.mxu0 0.0
    %2672 = vmatprep.subr.mxu0 0.0
    %2673 = vmatpush1.msra.mxu0 0.0
    %2674 = vmatprep.subr.mxu0 0.0
    %2675 = vmatpush1.msra.mxu0 0.0
    %2676 = vmatprep.subr.mxu0 0.0
    %2677 = vmatpush1.msra.mxu0 0.0
    %2678 = vmatprep.subr.mxu0 0.0
    %2679 = vmatpush1.msra.mxu0 0.0
    %2680 = vmatprep.mubr.f32.mxu0 0.0
    %v2681 = vand.u32 %v2275, 4294901760
    %2682 = vmatmul.mubr.f32.gmra.mrb[0].mxu0 %v2681
    %v2683 = vpop.f32.mrb[0].mxu0
    %v2684 = vadd.f32 %v2601, %v2683
    %v2685 = vpop.f32.mrb[0].mxu0
    %2686 = vdwg.mxu0
    %2687 = vmatprep.subr.mxu0 0.0
    %v2688 = vand.u32 %v57, 4294901760
    %2689 = vmatpush1.msra.mxu0 %v2688
    %2690 = vmatprep.subr.mxu0 0.0
    %v2691 = vand.u32 %v58, 4294901760
    %2692 = vmatpush1.msra.mxu0 %v2691
    %2693 = vmatprep.subr.mxu0 0.0
    %v2694 = vand.u32 %v59, 4294901760
    %2695 = vmatpush1.msra.mxu0 %v2694
    %2696 = vmatprep.subr.mxu0 0.0
    %v2697 = vand.u32 %v60, 4294901760
    %2698 = vmatpush1.msra.mxu0 %v2697
    %2699 = vmatprep.subr.mxu0 0.0
    %2700 = vmatpush1.msra.mxu0 0.0
    %2701 = vmatprep.subr.mxu0 0.0
    %2702 = vmatpush1.msra.mxu0 0.0
    %2703 = vmatprep.subr.mxu0 0.0
    %2704 = vmatpush1.msra.mxu0 0.0
    %2705 = vmatprep.subr.mxu0 0.0
    %2706 = vmatpush1.msra.mxu0 0.0
    %2707 = vmatprep.subr.mxu0 0.0
    %2708 = vmatpush1.msra.mxu0 0.0
    %2709 = vmatprep.subr.mxu0 0.0
    %2710 = vmatpush1.msra.mxu0 0.0
    %2711 = vmatprep.subr.mxu0 0.0
    %2712 = vmatpush1.msra.mxu0 0.0
    %2713 = vmatprep.subr.mxu0 0.0
    %2714 = vmatpush1.msra.mxu0 0.0
    %2715 = vmatprep.subr.mxu0 0.0
    %2716 = vmatpush1.msra.mxu0 0.0
    %2717 = vmatprep.subr.mxu0 0.0
    %2718 = vmatpush1.msra.mxu0 0.0
    %2719 = vmatprep.subr.mxu0 0.0
    %2720 = vmatpush1.msra.mxu0 0.0
    %2721 = vmatprep.subr.mxu0 0.0
    %2722 = vmatpush1.msra.mxu0 0.0
    %2723 = vmatprep.subr.mxu0 0.0
    %2724 = vmatpush1.msra.mxu0 0.0
    %2725 = vmatprep.subr.mxu0 0.0
    %2726 = vmatpush1.msra.mxu0 0.0
    %2727 = vmatprep.subr.mxu0 0.0
    %2728 = vmatpush1.msra.mxu0 0.0
    %2729 = vmatprep.subr.mxu0 0.0
    %2730 = vmatpush1.msra.mxu0 0.0
    %2731 = vmatprep.subr.mxu0 0.0
    %2732 = vmatpush1.msra.mxu0 0.0
    %2733 = vmatprep.subr.mxu0 0.0
    %2734 = vmatpush1.msra.mxu0 0.0
    %2735 = vmatprep.subr.mxu0 0.0
    %2736 = vmatpush1.msra.mxu0 0.0
    %2737 = vmatprep.subr.mxu0 0.0
    %2738 = vmatpush1.msra.mxu0 0.0
    %2739 = vmatprep.subr.mxu0 0.0
    %2740 = vmatpush1.msra.mxu0 0.0
    %2741 = vmatprep.subr.mxu0 0.0
    %2742 = vmatpush1.msra.mxu0 0.0
    %2743 = vmatprep.subr.mxu0 0.0
    %2744 = vmatpush1.msra.mxu0 0.0
    %2745 = vmatprep.subr.mxu0 0.0
    %2746 = vmatpush1.msra.mxu0 0.0
    %2747 = vmatprep.subr.mxu0 0.0
    %2748 = vmatpush1.msra.mxu0 0.0
    %2749 = vmatprep.subr.mxu0 0.0
    %2750 = vmatpush1.msra.mxu0 0.0
    %2751 = vmatprep.subr.mxu0 0.0
    %2752 = vmatpush1.msra.mxu0 0.0
    %2753 = vmatprep.subr.mxu0 0.0
    %2754 = vmatpush1.msra.mxu0 0.0
    %2755 = vmatprep.mubr.f32.mxu0 0.0
    %v2756 = vand.u32 %v2275, 4294901760
    %2757 = vmatmul.mubr.f32.gmra.mrb[0].mxu0 %v2756
    %v2758 = vpop.f32.mrb[0].mxu0
    %v2759 = vadd.f32 %v2684, %v2758
    %v2760 = vpop.f32.mrb[0].mxu0
    %2761 = vdwg.mxu0
    %v2764 = vunpack.c.l.s4 1966171168
    %v2765 = vunpack.c.0.s8 %v2764
    %v2766 = vlaneseq
    %v2767 = vshrl.u32 %v2766, 7
    %v2768 = vsub.s32 %v2765, %v2767
    %v2769 = vrot.slane %v2759, %v2768
    %v2770 = vcombine.high %v2769, %v2769
    %v2772 = vunpack.c.l.s4 1966171168
    %v2773 = vunpack.c.0.s8 %v2772
    %v2774 = vlaneseq
    %v2775 = vshrl.u32 %v2774, 7
    %v2776 = vsub.s32 %v2773, %v2775
    %v2777 = vrot.slane %v2769, %v2776
    %v2779 = vunpack.c.l.s4 1966171168
    %v2780 = vunpack.c.0.s8 %v2779
    %v2781 = vlaneseq
    %v2782 = vshrl.u32 %v2781, 7
    %v2783 = vsub.s32 %v2780, %v2782
    %v2784 = vrot.slane %v2770, %v2783
    %v2785 = vlaneseq
    %v2786 = vshrl.u32 %v2785, 7
    %v2787 = vsub.s32 0, %v2786
    %v2788 = vrot.slane %v2777, %v2787
    %v2789 = vlaneseq
    %v2790 = vshrl.u32 %v2789, 7
    %v2791 = vsub.s32 0, %v2790
    %v2792 = vrot.slane %v2784, %v2791
    %v2795 = vadd.f32 %v2263, %v2788
    %v2796 = vadd.f32 %v2269, %v2792
    %v2798 = vlaneseq
    %v2799 = vshrl.u32 %v2798, 7
    %v2800 = vsub.s32 0, %v2799
    %v2801 = vrot.slane %v39, %v2800
    %v2803 = vadd.f32 %v2795, %v2801
    %v2804 = vadd.f32 %v2796, %v2801
    %v2805 = vsub.f32 0.0, %v2803
    %v2806 = vsub.f32 0.0, %v2804
    %v2807 = vmul.f32 %v2805, 1.442695
    %v2808 = vpow.pop %v2807
    %v2809 = vmul.f32 %v2806, 1.442695
    %v2810 = vpow.pop %v2809
    %v2811 = vadd.f32 %v2808, 1.0
    %v2812 = vadd.f32 %v2810, 1.0
    %v2813 = vrcp.pop %v2811
    %v2814 = vrcp.pop %v2812
    %v2816 = vlaneseq
    %v2817 = vshrl.u32 %v2816, 7
    %v2818 = vsub.s32 0, %v2817
    %v2819 = vrot.slane %v40, %v2818
    %v2821 = vmul.f32 %v2813, %v2819
    %v2822 = vmul.f32 %v2814, %v2819
    %v2823 = vsel %vm61, %v2821, 0.0
    %2824 = vadd.xlane.f32.xlu0 %v2823
    %v2825 = vpop.xlane.xlu0 %2824
    %v2826 = vsel %vm61, %v2822, 0.0
    %2827 = vadd.xlane.f32.xlu0 %v2826
    %v2828 = vpop.xlane.xlu0 %2827
    %v2829 = vmul.f32 %v2825, %v1720
    %v2830 = vmul.f32 %v2828, %v1721
    %v2831 = vsel %vm61, %v2829, 0.0
    %v2832 = vrot.slane %v2831, 4
    %v2833 = vadd.f32 %v2831, %v2832
    %v2834 = vrot.slane %v2833, 2
    %v2835 = vadd.f32 %v2833, %v2834
    %v2836 = vrot.slane %v2835, 1
    %v2837 = vadd.f32 %v2835, %v2836
    %v2838 = vsel %vm61, %v2830, 0.0
    %v2839 = vrot.slane %v2838, 4
    %v2840 = vadd.f32 %v2838, %v2839
    %v2841 = vrot.slane %v2840, 2
    %v2842 = vadd.f32 %v2840, %v2841
    %v2843 = vrot.slane %v2842, 1
    %v2844 = vadd.f32 %v2842, %v2843
    %v2847 = vsel %vm1000, %v2844, %v2837
    %vm2849 = vcmask 254976
    %2850 = vst.msk [vmem:[#allocation2] sm:$0x3] %vm2849, %v2847
    // Predicated region
    $region22: #{tpu_custom_call.1} parent=1 // pred_check
      _
    $region23: #{tpu_custom_call.1} parent=1 // pred_check_branch
      %2852 = sbr.rel (0) target = $region25
    $region24: #{tpu_custom_call.1} parent=1 // pred_region
      %s2854 = ssub.s32 32, 32
      %2855 = vsyncadd [#allocation3], %s2854
      %s2857 = sshll.u32 [#allocation2], 4
      %s2858 = int_to_ptr.vmem [resolvable:$true] %s2857
      %2860 = dma.vmem_to_hbm [thread:$0]  %s2858, 32, %s5, [#allocation3]
    $region25: #{tpu_custom_call.1} parent=1 // pred_fallthru
      _
    // Predicated region
    $region26: #{tpu_custom_call.1} parent=1 // pred_check
      _
    $region27: #{tpu_custom_call.1} parent=1 // pred_check_branch
      %2862 = sbr.rel (0) target = $region29
    $region28: #{tpu_custom_call.1} parent=1 // pred_region
      %2863 = dma.done [#allocation3], 32
    $region29: #{tpu_custom_call.1} parent=1 // pred_fallthru
      _
    %2864 = vsyncpa [#allocation3], 1

</llo_original>
